<compile_context>
chip_gen: v7x
topology: tpu7x:2x2x1
jax: 0.10.0
libtpu: 0.0.40
codegen_flags: <defaults>
</compile_context>

<pallas_src>
import math

import jax
import jax.numpy as jnp
from jax.experimental import pallas as pl
from jax.experimental.pallas import tpu as pltpu

# ---- module hyperparameters (num_heads=4 matches the hardcoded repeat of 4) ----
D_MODEL = 32
NUM_HEADS = 4
INPUT_DIMS = 32
DEPTH = D_MODEL // NUM_HEADS
BATCH = 2
SEQ = 8


# ---------------------------------------------------------------------------
# Fully fused MHA kernel: the whole batch in a single invocation (no grid).
# ---------------------------------------------------------------------------
def _mha_kernel(q_ref, k_ref, v_ref, mask_ref,
                wq_ref, wk_ref, wv_ref,
                bq_ref, bk_ref, bv_ref,
                wp_ref, bp_ref,
                out_ref, attn_ref):
    B, S, _ = q_ref.shape
    H, D = NUM_HEADS, DEPTH

    # ---- Q/K/V projections over the whole batch at once: (B*S, 32) @ (32, 32)
    q2 = q_ref[...].reshape(B * S, INPUT_DIMS)
    k2 = k_ref[...].reshape(B * S, INPUT_DIMS)
    v2 = v_ref[...].reshape(B * S, INPUT_DIMS)

    qp = (jnp.dot(q2, wq_ref[...], preferred_element_type=jnp.float32)
          + bq_ref[...]).reshape(B, S, H * D)
    kp = (jnp.dot(k2, wk_ref[...], preferred_element_type=jnp.float32)
          + bk_ref[...]).reshape(B, S, H * D)
    vp = (jnp.dot(v2, wv_ref[...], preferred_element_type=jnp.float32)
          + bv_ref[...]).reshape(B, S, H * D)

    # ---- split heads into a leading batch axis: (B, S, H*D) -> (B*H, S, D)
    def split_heads(x):
        heads = [x[:, :, h * D:(h + 1) * D] for h in range(H)]
        return jnp.stack(heads, axis=1).reshape(B * H, S, D)

    qh = split_heads(qp)
    kh = split_heads(kp)
    vh = split_heads(vp)

    # ---- scaled scores for all heads in one batched MXU pass
    s = jnp.einsum("bqd,bkd->bqk", qh, kh,
                   preferred_element_type=jnp.float32)              # (B*H, S, S)
    s = s * jnp.float32(1.0 / math.sqrt(D))

    # mask broadcast over heads (leading-dim broadcast, no lane relayout)
    s4 = s.reshape(B, H, S, S) + mask_ref[...][:, None] * jnp.float32(-1.0e9)

    # ---- exact, numerically-stable softmax (rows sum to 1)
    m = jnp.max(s4, axis=-1, keepdims=True)
    e = jnp.exp(s4 - m)
    attn4 = e / jnp.sum(e, axis=-1, keepdims=True)                  # (B, H, S, S)

    # ---- attn @ V for all heads in one batched MXU pass
    ov = jnp.einsum("bqk,bkd->bqd", attn4.reshape(B * H, S, S), vh,
                    preferred_element_type=jnp.float32)             # (B*H, S, D)

    # ---- lane-dense concat of heads + fused output projection
    ov4 = ov.reshape(B, H, S, D)
    concat = jnp.concatenate([ov4[:, h] for h in range(H)], axis=-1)  # (B, S, 32)
    out = (jnp.dot(concat.reshape(B * S, H * D), wp_ref[...],
                   preferred_element_type=jnp.float32) + bp_ref[...])
    out_ref[...] = out.reshape(B, S, H * D).astype(out_ref.dtype)

    # ---- attention weights: one lane-dense store, heads concatenated on lanes
    attn_ref[...] = jnp.concatenate([attn4[:, h] for h in range(H)],
                                    axis=-1).astype(attn_ref.dtype)   # (B, S, H*S)


def multi_head_attention(v, k, q, mask, params):
    """v, k, q: (B, S, INPUT_DIMS); mask: (B, S, S) with 1 = masked out.
    Returns (output (B, S, D_MODEL), attention_weights (B, H, S, S))."""
    # TODO(synk): PyTorch's optional mask=None path is not implemented; pass a
    # zero mask for "no masking".
    B, S, _ = q.shape
    vmem = lambda: pl.BlockSpec(memory_space=pltpu.MemorySpace.VMEM)
    out, attn_ld = pl.pallas_call(
        _mha_kernel,
        out_shape=(
            jax.ShapeDtypeStruct((B, S, D_MODEL), q.dtype),
            jax.ShapeDtypeStruct((B, S, NUM_HEADS * S), jnp.float32),
        ),
        in_specs=[vmem() for _ in range(12)],
        out_specs=(vmem(), vmem()),
    )(q, k, v, mask,
      params["w_q"], params["w_k"], params["w_v"],
      params["b_q"], params["b_k"], params["b_v"],
      params["w_proj"], params["b_proj"])
    # Free layout fix-up outside the kernel: (B, S, H*S) -> (B, H, S, S).
    attn = attn_ld.reshape(B, S, NUM_HEADS, S).transpose(0, 2, 1, 3)
    return out, attn


# ---------------------------------------------------------------------------
# Parameter init (PyTorch nn.Linear-style) and a pure-JAX reference.
# ---------------------------------------------------------------------------
def init_params(key):
    ks = jax.random.split(key, 8)

    def lin(kw, kb, fan_in, fan_out):
        scale = 1.0 / math.sqrt(fan_in)
        w = jax.random.uniform(kw, (fan_in, fan_out), jnp.float32, -scale, scale)
        b = jax.random.uniform(kb, (1, fan_out), jnp.float32, -scale, scale)
        return w, b

    wq, bq = lin(ks[0], ks[1], INPUT_DIMS, D_MODEL)
    wk, bk = lin(ks[2], ks[3], INPUT_DIMS, D_MODEL)
    wv, bv = lin(ks[4], ks[5], INPUT_DIMS, D_MODEL)
    wp, bp = lin(ks[6], ks[7], D_MODEL, D_MODEL)
    return dict(w_q=wq, b_q=bq, w_k=wk, b_k=bk, w_v=wv, b_v=bv,
                w_proj=wp, b_proj=bp)


def reference_mha(v, k, q, mask, params):
    """Pure-JAX mirror of the PyTorch forward (exact softmax)."""
    B, S, _ = q.shape
    qp = q @ params["w_q"] + params["b_q"]
    kp = k @ params["w_k"] + params["b_k"]
    vp = v @ params["w_v"] + params["b_v"]

    def split(x):
        return jnp.transpose(x.reshape(B, S, NUM_HEADS, DEPTH), (0, 2, 1, 3))

    qh, kh, vh = split(qp), split(kp), split(vp)
    maskh = jnp.repeat(mask[:, None, :, :], NUM_HEADS, axis=1)
    qk = jnp.einsum("bhqd,bhkd->bhqk", qh, kh) / jnp.sqrt(jnp.float32(DEPTH))
    qk = qk + maskh * (-1.0e9)
    attn = jax.nn.softmax(qk, axis=-1)
    out_h = jnp.einsum("bhqk,bhkd->bhqd", attn, vh)
    concat = jnp.transpose(out_h, (0, 2, 1, 3)).reshape(B, S, D_MODEL)
    out = concat @ params["w_proj"] + params["b_proj"]
    return out, attn


if __name__ == "__main__":
    key = jax.random.PRNGKey(0)
    kparam, kq, kk, kv, km = jax.random.split(key, 5)

    params = init_params(kparam)
    q = jax.random.normal(kq, (BATCH, SEQ, INPUT_DIMS), jnp.float32)
    k = jax.random.normal(kk, (BATCH, SEQ, INPUT_DIMS), jnp.float32)
    v = jax.random.normal(kv, (BATCH, SEQ, INPUT_DIMS), jnp.float32)
    # padding-style mask: 1 = masked out, 0 = attend
    mask = (jax.random.uniform(km, (BATCH, SEQ, SEQ)) > 0.8).astype(jnp.float32)

    out, attn_w = multi_head_attention(v, k, q, mask, params)
    out = jax.block_until_ready(out)
    attn_w = jax.block_until_ready(attn_w)

    ref_out, ref_attn = reference_mha(v, k, q, mask, params)
    assert out.shape == (BATCH, SEQ, D_MODEL)
    assert attn_w.shape == (BATCH, NUM_HEADS, SEQ, SEQ)
    assert jnp.allclose(attn_w, ref_attn, atol=1e-3, rtol=1e-3)
    assert jnp.allclose(out, ref_out, atol=5e-3, rtol=5e-3)

    print("KERNEL_OK")
</pallas_src>

<mosaic_0001>
module attributes {stable_mosaic.version = 11 : i64} {
  func.func @_mha_kernel(%arg0: memref<2x8x32xf32, #tpu.memory_space<vmem>>, %arg1: memref<2x8x32xf32, #tpu.memory_space<vmem>>, %arg2: memref<2x8x32xf32, #tpu.memory_space<vmem>>, %arg3: memref<2x8x8xf32, #tpu.memory_space<vmem>>, %arg4: memref<32x32xf32, #tpu.memory_space<vmem>>, %arg5: memref<32x32xf32, #tpu.memory_space<vmem>>, %arg6: memref<32x32xf32, #tpu.memory_space<vmem>>, %arg7: memref<1x32xf32, #tpu.memory_space<vmem>>, %arg8: memref<1x32xf32, #tpu.memory_space<vmem>>, %arg9: memref<1x32xf32, #tpu.memory_space<vmem>>, %arg10: memref<32x32xf32, #tpu.memory_space<vmem>>, %arg11: memref<1x32xf32, #tpu.memory_space<vmem>>, %arg12: memref<2x8x32xf32, #tpu.memory_space<vmem>>, %arg13: memref<2x8x32xf32, #tpu.memory_space<vmem>>) attributes {dimension_semantics = [], scalar_prefetch = 0 : i64, scratch_operands = 0 : i64, tpu.core_type = #tpu.core_type<tc>} {
    %c0 = arith.constant 0 : index
    %c0_0 = arith.constant 0 : index
    %c0_1 = arith.constant 0 : index
    %0 = vector.load %arg0[%c0, %c0_0, %c0_1] : memref<2x8x32xf32, #tpu.memory_space<vmem>>, vector<2x8x32xf32>
    %1 = vector.shape_cast %0 : vector<2x8x32xf32> to vector<16x32xf32>
    %c0_2 = arith.constant 0 : index
    %c0_3 = arith.constant 0 : index
    %c0_4 = arith.constant 0 : index
    %2 = vector.load %arg1[%c0_2, %c0_3, %c0_4] : memref<2x8x32xf32, #tpu.memory_space<vmem>>, vector<2x8x32xf32>
    %3 = vector.shape_cast %2 : vector<2x8x32xf32> to vector<16x32xf32>
    %c0_5 = arith.constant 0 : index
    %c0_6 = arith.constant 0 : index
    %c0_7 = arith.constant 0 : index
    %4 = vector.load %arg2[%c0_5, %c0_6, %c0_7] : memref<2x8x32xf32, #tpu.memory_space<vmem>>, vector<2x8x32xf32>
    %5 = vector.shape_cast %4 : vector<2x8x32xf32> to vector<16x32xf32>
    %c0_8 = arith.constant 0 : index
    %c0_9 = arith.constant 0 : index
    %6 = vector.load %arg4[%c0_8, %c0_9] : memref<32x32xf32, #tpu.memory_space<vmem>>, vector<32x32xf32>
    %cst = arith.constant dense<0.000000e+00> : vector<16x32xf32>
    %7 = tpu.matmul %1, %6, %cst {dimension_numbers = #tpu.dot_dimension_numbers<[1], [0], [0], [1], [0, 0, 1, 1], [], []>} : vector<16x32xf32>, vector<32x32xf32>, vector<16x32xf32> -> vector<16x32xf32>
    %c0_10 = arith.constant 0 : index
    %c0_11 = arith.constant 0 : index
    %8 = vector.load %arg7[%c0_10, %c0_11] : memref<1x32xf32, #tpu.memory_space<vmem>>, vector<1x32xf32>
    %9 = vector.broadcast %8 : vector<1x32xf32> to vector<16x32xf32>
    %10 = arith.addf %7, %9 : vector<16x32xf32>
    %11 = vector.shape_cast %10 : vector<16x32xf32> to vector<2x8x32xf32>
    %c0_12 = arith.constant 0 : index
    %c0_13 = arith.constant 0 : index
    %12 = vector.load %arg5[%c0_12, %c0_13] : memref<32x32xf32, #tpu.memory_space<vmem>>, vector<32x32xf32>
    %cst_14 = arith.constant dense<0.000000e+00> : vector<16x32xf32>
    %13 = tpu.matmul %3, %12, %cst_14 {dimension_numbers = #tpu.dot_dimension_numbers<[1], [0], [0], [1], [0, 0, 1, 1], [], []>} : vector<16x32xf32>, vector<32x32xf32>, vector<16x32xf32> -> vector<16x32xf32>
    %c0_15 = arith.constant 0 : index
    %c0_16 = arith.constant 0 : index
    %14 = vector.load %arg8[%c0_15, %c0_16] : memref<1x32xf32, #tpu.memory_space<vmem>>, vector<1x32xf32>
    %15 = vector.broadcast %14 : vector<1x32xf32> to vector<16x32xf32>
    %16 = arith.addf %13, %15 : vector<16x32xf32>
    %17 = vector.shape_cast %16 : vector<16x32xf32> to vector<2x8x32xf32>
    %c0_17 = arith.constant 0 : index
    %c0_18 = arith.constant 0 : index
    %18 = vector.load %arg6[%c0_17, %c0_18] : memref<32x32xf32, #tpu.memory_space<vmem>>, vector<32x32xf32>
    %cst_19 = arith.constant dense<0.000000e+00> : vector<16x32xf32>
    %19 = tpu.matmul %5, %18, %cst_19 {dimension_numbers = #tpu.dot_dimension_numbers<[1], [0], [0], [1], [0, 0, 1, 1], [], []>} : vector<16x32xf32>, vector<32x32xf32>, vector<16x32xf32> -> vector<16x32xf32>
    %c0_20 = arith.constant 0 : index
    %c0_21 = arith.constant 0 : index
    %20 = vector.load %arg9[%c0_20, %c0_21] : memref<1x32xf32, #tpu.memory_space<vmem>>, vector<1x32xf32>
    %21 = vector.broadcast %20 : vector<1x32xf32> to vector<16x32xf32>
    %22 = arith.addf %19, %21 : vector<16x32xf32>
    %23 = vector.shape_cast %22 : vector<16x32xf32> to vector<2x8x32xf32>
    %24 = vector.extract_strided_slice %11 {offsets = [0, 0, 0], sizes = [2, 8, 8], strides = [1, 1, 1]} : vector<2x8x32xf32> to vector<2x8x8xf32>
    %25 = vector.extract_strided_slice %11 {offsets = [0, 0, 8], sizes = [2, 8, 8], strides = [1, 1, 1]} : vector<2x8x32xf32> to vector<2x8x8xf32>
    %26 = vector.extract_strided_slice %11 {offsets = [0, 0, 16], sizes = [2, 8, 8], strides = [1, 1, 1]} : vector<2x8x32xf32> to vector<2x8x8xf32>
    %27 = vector.extract_strided_slice %11 {offsets = [0, 0, 24], sizes = [2, 8, 8], strides = [1, 1, 1]} : vector<2x8x32xf32> to vector<2x8x8xf32>
    %28 = vector.shape_cast %24 : vector<2x8x8xf32> to vector<2x1x8x8xf32>
    %29 = vector.shape_cast %25 : vector<2x8x8xf32> to vector<2x1x8x8xf32>
    %30 = vector.shape_cast %26 : vector<2x8x8xf32> to vector<2x1x8x8xf32>
    %31 = vector.shape_cast %27 : vector<2x8x8xf32> to vector<2x1x8x8xf32>
    %32 = tpu.concatenate %28, %29, %30, %31 in 1 : vector<2x1x8x8xf32>, vector<2x1x8x8xf32>, vector<2x1x8x8xf32>, vector<2x1x8x8xf32> -> vector<2x4x8x8xf32>
    %33 = vector.shape_cast %32 : vector<2x4x8x8xf32> to vector<8x8x8xf32>
    %34 = vector.extract_strided_slice %17 {offsets = [0, 0, 0], sizes = [2, 8, 8], strides = [1, 1, 1]} : vector<2x8x32xf32> to vector<2x8x8xf32>
    %35 = vector.extract_strided_slice %17 {offsets = [0, 0, 8], sizes = [2, 8, 8], strides = [1, 1, 1]} : vector<2x8x32xf32> to vector<2x8x8xf32>
    %36 = vector.extract_strided_slice %17 {offsets = [0, 0, 16], sizes = [2, 8, 8], strides = [1, 1, 1]} : vector<2x8x32xf32> to vector<2x8x8xf32>
    %37 = vector.extract_strided_slice %17 {offsets = [0, 0, 24], sizes = [2, 8, 8], strides = [1, 1, 1]} : vector<2x8x32xf32> to vector<2x8x8xf32>
    %38 = vector.shape_cast %34 : vector<2x8x8xf32> to vector<2x1x8x8xf32>
    %39 = vector.shape_cast %35 : vector<2x8x8xf32> to vector<2x1x8x8xf32>
    %40 = vector.shape_cast %36 : vector<2x8x8xf32> to vector<2x1x8x8xf32>
    %41 = vector.shape_cast %37 : vector<2x8x8xf32> to vector<2x1x8x8xf32>
    %42 = tpu.concatenate %38, %39, %40, %41 in 1 : vector<2x1x8x8xf32>, vector<2x1x8x8xf32>, vector<2x1x8x8xf32>, vector<2x1x8x8xf32> -> vector<2x4x8x8xf32>
    %43 = vector.shape_cast %42 : vector<2x4x8x8xf32> to vector<8x8x8xf32>
    %44 = vector.extract_strided_slice %23 {offsets = [0, 0, 0], sizes = [2, 8, 8], strides = [1, 1, 1]} : vector<2x8x32xf32> to vector<2x8x8xf32>
    %45 = vector.extract_strided_slice %23 {offsets = [0, 0, 8], sizes = [2, 8, 8], strides = [1, 1, 1]} : vector<2x8x32xf32> to vector<2x8x8xf32>
    %46 = vector.extract_strided_slice %23 {offsets = [0, 0, 16], sizes = [2, 8, 8], strides = [1, 1, 1]} : vector<2x8x32xf32> to vector<2x8x8xf32>
    %47 = vector.extract_strided_slice %23 {offsets = [0, 0, 24], sizes = [2, 8, 8], strides = [1, 1, 1]} : vector<2x8x32xf32> to vector<2x8x8xf32>
    %48 = vector.shape_cast %44 : vector<2x8x8xf32> to vector<2x1x8x8xf32>
    %49 = vector.shape_cast %45 : vector<2x8x8xf32> to vector<2x1x8x8xf32>
    %50 = vector.shape_cast %46 : vector<2x8x8xf32> to vector<2x1x8x8xf32>
    %51 = vector.shape_cast %47 : vector<2x8x8xf32> to vector<2x1x8x8xf32>
    %52 = tpu.concatenate %48, %49, %50, %51 in 1 : vector<2x1x8x8xf32>, vector<2x1x8x8xf32>, vector<2x1x8x8xf32>, vector<2x1x8x8xf32> -> vector<2x4x8x8xf32>
    %53 = vector.shape_cast %52 : vector<2x4x8x8xf32> to vector<8x8x8xf32>
    "tpu.trace_start"() <{level = 10 : i32, message = "bqd,bkd->bqk"}> : () -> ()
    %cst_22 = arith.constant dense<0.000000e+00> : vector<8x8x8xf32>
    %54 = tpu.matmul %33, %43, %cst_22 {dimension_numbers = #tpu.dot_dimension_numbers<[2], [2], [1], [1], [0, 0, 0, 1, 1, 1], [0], [0]>} : vector<8x8x8xf32>, vector<8x8x8xf32>, vector<8x8x8xf32> -> vector<8x8x8xf32>
    "tpu.trace_stop"() : () -> ()
    %cst_23 = arith.constant 0.353553385 : f32
    %55 = vector.broadcast %cst_23 : f32 to vector<8x8x8xf32>
    %56 = arith.mulf %54, %55 : vector<8x8x8xf32>
    %57 = vector.shape_cast %56 : vector<8x8x8xf32> to vector<2x4x8x8xf32>
    %c0_24 = arith.constant 0 : index
    %c0_25 = arith.constant 0 : index
    %c0_26 = arith.constant 0 : index
    %58 = vector.load %arg3[%c0_24, %c0_25, %c0_26] : memref<2x8x8xf32, #tpu.memory_space<vmem>>, vector<2x8x8xf32>
    %59 = vector.shape_cast %58 : vector<2x8x8xf32> to vector<2x1x8x8xf32>
    %cst_27 = arith.constant -1.000000e+09 : f32
    %60 = vector.broadcast %cst_27 : f32 to vector<2x1x8x8xf32>
    %61 = arith.mulf %59, %60 : vector<2x1x8x8xf32>
    %62 = vector.broadcast %61 : vector<2x1x8x8xf32> to vector<2x4x8x8xf32>
    %63 = arith.addf %57, %62 : vector<2x4x8x8xf32>
    %cst_28 = arith.constant dense<0xFF800000> : vector<2x4x8xf32>
    %64 = vector.multi_reduction <maximumf>, %63, %cst_28 [3] : vector<2x4x8x8xf32> to vector<2x4x8xf32>
    %65 = vector.shape_cast %64 : vector<2x4x8xf32> to vector<2x4x8x1xf32>
    %66 = vector.broadcast %65 : vector<2x4x8x1xf32> to vector<2x4x8x8xf32>
    %67 = arith.subf %63, %66 : vector<2x4x8x8xf32>
    %68 = math.exp %67 : vector<2x4x8x8xf32>
    %cst_29 = arith.constant dense<0.000000e+00> : vector<2x4x8xf32>
    %69 = vector.multi_reduction <add>, %68, %cst_29 [3] : vector<2x4x8x8xf32> to vector<2x4x8xf32>
    %70 = vector.shape_cast %69 : vector<2x4x8xf32> to vector<2x4x8x1xf32>
    %71 = vector.broadcast %70 : vector<2x4x8x1xf32> to vector<2x4x8x8xf32>
    %72 = arith.divf %68, %71 : vector<2x4x8x8xf32>
    %73 = vector.shape_cast %72 : vector<2x4x8x8xf32> to vector<8x8x8xf32>
    "tpu.trace_start"() <{level = 10 : i32, message = "bqk,bkd->bqd"}> : () -> ()
    %cst_30 = arith.constant dense<0.000000e+00> : vector<8x8x8xf32>
    %74 = tpu.matmul %73, %53, %cst_30 {dimension_numbers = #tpu.dot_dimension_numbers<[2], [1], [1], [2], [0, 0, 0, 1, 1, 2], [0], [0]>} : vector<8x8x8xf32>, vector<8x8x8xf32>, vector<8x8x8xf32> -> vector<8x8x8xf32>
    "tpu.trace_stop"() : () -> ()
    %75 = vector.shape_cast %74 : vector<8x8x8xf32> to vector<2x4x8x8xf32>
    %76 = vector.extract_strided_slice %75 {offsets = [0, 0, 0, 0], sizes = [2, 1, 8, 8], strides = [1, 1, 1, 1]} : vector<2x4x8x8xf32> to vector<2x1x8x8xf32>
    %77 = vector.shape_cast %76 : vector<2x1x8x8xf32> to vector<2x8x8xf32>
    %78 = vector.extract_strided_slice %75 {offsets = [0, 1, 0, 0], sizes = [2, 1, 8, 8], strides = [1, 1, 1, 1]} : vector<2x4x8x8xf32> to vector<2x1x8x8xf32>
    %79 = vector.shape_cast %78 : vector<2x1x8x8xf32> to vector<2x8x8xf32>
    %80 = vector.extract_strided_slice %75 {offsets = [0, 2, 0, 0], sizes = [2, 1, 8, 8], strides = [1, 1, 1, 1]} : vector<2x4x8x8xf32> to vector<2x1x8x8xf32>
    %81 = vector.shape_cast %80 : vector<2x1x8x8xf32> to vector<2x8x8xf32>
    %82 = vector.extract_strided_slice %75 {offsets = [0, 3, 0, 0], sizes = [2, 1, 8, 8], strides = [1, 1, 1, 1]} : vector<2x4x8x8xf32> to vector<2x1x8x8xf32>
    %83 = vector.shape_cast %82 : vector<2x1x8x8xf32> to vector<2x8x8xf32>
    %84 = tpu.concatenate %77, %79, %81, %83 in 2 : vector<2x8x8xf32>, vector<2x8x8xf32>, vector<2x8x8xf32>, vector<2x8x8xf32> -> vector<2x8x32xf32>
    %85 = vector.shape_cast %84 : vector<2x8x32xf32> to vector<16x32xf32>
    %c0_31 = arith.constant 0 : index
    %c0_32 = arith.constant 0 : index
    %86 = vector.load %arg10[%c0_31, %c0_32] : memref<32x32xf32, #tpu.memory_space<vmem>>, vector<32x32xf32>
    %cst_33 = arith.constant dense<0.000000e+00> : vector<16x32xf32>
    %87 = tpu.matmul %85, %86, %cst_33 {dimension_numbers = #tpu.dot_dimension_numbers<[1], [0], [0], [1], [0, 0, 1, 1], [], []>} : vector<16x32xf32>, vector<32x32xf32>, vector<16x32xf32> -> vector<16x32xf32>
    %c0_34 = arith.constant 0 : index
    %c0_35 = arith.constant 0 : index
    %88 = vector.load %arg11[%c0_34, %c0_35] : memref<1x32xf32, #tpu.memory_space<vmem>>, vector<1x32xf32>
    %89 = vector.broadcast %88 : vector<1x32xf32> to vector<16x32xf32>
    %90 = arith.addf %87, %89 : vector<16x32xf32>
    %91 = vector.shape_cast %90 : vector<16x32xf32> to vector<2x8x32xf32>
    %c0_36 = arith.constant 0 : index
    %c0_37 = arith.constant 0 : index
    %c0_38 = arith.constant 0 : index
    %92 = vector.load %arg12[%c0_36, %c0_37, %c0_38] : memref<2x8x32xf32, #tpu.memory_space<vmem>>, vector<2x8x32xf32>
    tpu.vector_store %arg12[%c0_36, %c0_37, %c0_38], %91 {strides = array<i32>} : memref<2x8x32xf32, #tpu.memory_space<vmem>>, vector<2x8x32xf32>,
    %93 = vector.extract_strided_slice %72 {offsets = [0, 0, 0, 0], sizes = [2, 1, 8, 8], strides = [1, 1, 1, 1]} : vector<2x4x8x8xf32> to vector<2x1x8x8xf32>
    %94 = vector.shape_cast %93 : vector<2x1x8x8xf32> to vector<2x8x8xf32>
    %95 = vector.extract_strided_slice %72 {offsets = [0, 1, 0, 0], sizes = [2, 1, 8, 8], strides = [1, 1, 1, 1]} : vector<2x4x8x8xf32> to vector<2x1x8x8xf32>
    %96 = vector.shape_cast %95 : vector<2x1x8x8xf32> to vector<2x8x8xf32>
    %97 = vector.extract_strided_slice %72 {offsets = [0, 2, 0, 0], sizes = [2, 1, 8, 8], strides = [1, 1, 1, 1]} : vector<2x4x8x8xf32> to vector<2x1x8x8xf32>
    %98 = vector.shape_cast %97 : vector<2x1x8x8xf32> to vector<2x8x8xf32>
    %99 = vector.extract_strided_slice %72 {offsets = [0, 3, 0, 0], sizes = [2, 1, 8, 8], strides = [1, 1, 1, 1]} : vector<2x4x8x8xf32> to vector<2x1x8x8xf32>
    %100 = vector.shape_cast %99 : vector<2x1x8x8xf32> to vector<2x8x8xf32>
    %101 = tpu.concatenate %94, %96, %98, %100 in 2 : vector<2x8x8xf32>, vector<2x8x8xf32>, vector<2x8x8xf32>, vector<2x8x8xf32> -> vector<2x8x32xf32>
    %c0_39 = arith.constant 0 : index
    %c0_40 = arith.constant 0 : index
    %c0_41 = arith.constant 0 : index
    %102 = vector.load %arg13[%c0_39, %c0_40, %c0_41] : memref<2x8x32xf32, #tpu.memory_space<vmem>>, vector<2x8x32xf32>
    tpu.vector_store %arg13[%c0_39, %c0_40, %c0_41], %101 {strides = array<i32>} : memref<2x8x32xf32, #tpu.memory_space<vmem>>, vector<2x8x32xf32>,
    return
  }
}

</mosaic_0001>

<llo_original>
// kernel: tpu_custom_call.1
$region0: #{tpu_custom_call.1}
  #allocation0 [shape = 'u32[]', space=smem, size = 0x4, offset = 0x4, fixed_abs, tag = 'smem constant byte address 0x4 - core index']
  #allocation1 [shape = 'u32[144,128]{1,0:T(1,128)}', space=vmem, size = 0x12000, scoped, tag = 'internal scratch']
  %s0 = inlined_call_operand.hbm [shape: f32[2,8,32], index: 0, kind: input, shape index: {}]
  %s1 = inlined_call_operand.hbm [shape: f32[2,8,32], index: 1, kind: input, shape index: {}]
  %s2 = inlined_call_operand.hbm [shape: f32[2,8,32], index: 2, kind: input, shape index: {}]
  %s3 = inlined_call_operand.hbm [shape: f32[2,8,8], index: 3, kind: input, shape index: {}]
  %s4 = inlined_call_operand.hbm [shape: f32[32,32], index: 4, kind: input, shape index: {}]
  %s5 = inlined_call_operand.hbm [shape: f32[32,32], index: 5, kind: input, shape index: {}]
  %s6 = inlined_call_operand.hbm [shape: f32[32,32], index: 6, kind: input, shape index: {}]
  %s7 = inlined_call_operand.vmem [shape: f32[1,32], index: 7, kind: input, shape index: {}]
  %s8 = inlined_call_operand.vmem [shape: f32[1,32], index: 8, kind: input, shape index: {}]
  %s9 = inlined_call_operand.vmem [shape: f32[1,32], index: 9, kind: input, shape index: {}]
  %s10 = inlined_call_operand.vmem [shape: f32[32,32], index: 10, kind: input, shape index: {}]
  %s11 = inlined_call_operand.vmem [shape: f32[1,32], index: 11, kind: input, shape index: {}]
  %s12 = inlined_call_operand.hbm [shape: f32[2,8,32], index: 12, kind: output, shape index: {0}]
  %s13 = inlined_call_operand.hbm [shape: f32[2,8,32], index: 13, kind: output, shape index: {1}]
  %14 = xla_tuple %s12, %s13
  %s15 = sld [smem:[#allocation0]]
  $region94: #{tpu_custom_call.1} parent=0
    _
  %s17 = ssub.s32 1, %s15
  %s18 = scalar_select 0, %s17, %s15
  $region1: #{tpu_custom_call.1} parent=0
    #allocation2 [shape = 'u8[8192]{0}', space=vmem, size = 0x2000, scoped, tag = 'input window, operand 0, single buffered']
    #allocation3 [shape = 's32[1]{0}', space=sflag, size = 0x4, scoped, tag = 'scoped memory for tpu_custom_call.1']
    #allocation4 [shape = 's32[1]{0}', space=sflag, size = 0x4, scoped, tag = 'scoped memory for tpu_custom_call.1']
    #allocation5 [shape = 'u8[8192]{0}', space=vmem, size = 0x2000, scoped, tag = 'input window, operand 1, single buffered']
    #allocation6 [shape = 's32[1]{0}', space=sflag, size = 0x4, scoped, tag = 'scoped memory for tpu_custom_call.1']
    #allocation7 [shape = 'u8[8192]{0}', space=vmem, size = 0x2000, scoped, tag = 'input window, operand 2, single buffered']
    #allocation8 [shape = 'u8[8192]{0}', space=vmem, size = 0x2000, scoped, tag = 'input window, operand 3, single buffered']
    #allocation9 [shape = 's32[1]{0}', space=sflag, size = 0x4, scoped, tag = 'scoped memory for tpu_custom_call.1']
    #allocation10 [shape = 'u8[16384]{0}', space=vmem, size = 0x4000, scoped, tag = 'input window, operand 4, single buffered']
    #allocation11 [shape = 'u8[16384]{0}', space=vmem, size = 0x4000, scoped, tag = 'input window, operand 5, single buffered']
    #allocation12 [shape = 's32[1]{0}', space=sflag, size = 0x4, scoped, tag = 'scoped memory for tpu_custom_call.1']
    #allocation13 [shape = 'u8[16384]{0}', space=vmem, size = 0x4000, scoped, tag = 'input window, operand 6, single buffered']
    #allocation14 [shape = 'u8[8192]{0}', space=vmem, size = 0x2000, scoped, tag = 'output window, operand 0, single buffered']
    #allocation15 [shape = 'u8[8192]{0}', space=vmem, size = 0x2000, scoped, tag = 'output window, operand 1, single buffered']
    #allocation16 [shape = 's32[1]{0}', space=sflag, size = 0x4, scoped, tag = 'scoped memory for tpu_custom_call.1']
    %19 = vsyncpa [#allocation3], 0
    %20 = vsyncpa [#allocation6], 0
    %21 = vsyncpa [#allocation9], 0
    %22 = vsyncpa [#allocation12], 0
    %23 = vsyncpa [#allocation4], 0
    %24 = vsyncpa [#allocation16], 0
    // Predicated region
    $region2: #{tpu_custom_call.1} parent=1 // pred_check
      _
    $region3: #{tpu_custom_call.1} parent=1 // pred_check_branch
      %26 = sbr.rel (0) target = $region5
    $region4: #{tpu_custom_call.1} parent=1 // pred_region
      %s28 = ssub.s32 256, 256
      %29 = vsyncadd [#allocation3], %s28
      %s30 = sshll.u32 [#allocation2], 4
      %s31 = int_to_ptr.vmem [resolvable:$true] %s30
      %36 = dma.hbm_to_vmem [thread:$0]  %s0, 256, %s31, [#allocation3], 128, 128, 8
    $region5: #{tpu_custom_call.1} parent=1 // pred_fallthru
      _
    // Predicated region
    $region6: #{tpu_custom_call.1} parent=1 // pred_check
      _
    $region7: #{tpu_custom_call.1} parent=1 // pred_check_branch
      %38 = sbr.rel (0) target = $region9
    $region8: #{tpu_custom_call.1} parent=1 // pred_region
      %s40 = ssub.s32 256, 256
      %41 = vsyncadd [#allocation6], %s40
      %s42 = sshll.u32 [#allocation5], 4
      %s43 = int_to_ptr.vmem [resolvable:$true] %s42
      %48 = dma.hbm_to_vmem [thread:$0]  %s1, 256, %s43, [#allocation6], 128, 128, 8
    $region9: #{tpu_custom_call.1} parent=1 // pred_fallthru
      _
    // Predicated region
    $region10: #{tpu_custom_call.1} parent=1 // pred_check
      _
    $region11: #{tpu_custom_call.1} parent=1 // pred_check_branch
      %50 = sbr.rel (0) target = $region13
    $region12: #{tpu_custom_call.1} parent=1 // pred_region
      %s52 = ssub.s32 256, 256
      %53 = vsyncadd [#allocation6], %s52
      %s54 = sshll.u32 [#allocation7], 4
      %s55 = int_to_ptr.vmem [resolvable:$true] %s54
      %60 = dma.hbm_to_vmem [thread:$0]  %s2, 256, %s55, [#allocation6], 128, 128, 8
    $region13: #{tpu_custom_call.1} parent=1 // pred_fallthru
      _
    // Predicated region
    $region14: #{tpu_custom_call.1} parent=1 // pred_check
      _
    $region15: #{tpu_custom_call.1} parent=1 // pred_check_branch
      %62 = sbr.rel (0) target = $region17
    $region16: #{tpu_custom_call.1} parent=1 // pred_region
      %s64 = ssub.s32 256, 256
      %65 = vsyncadd [#allocation9], %s64
      %s66 = sshll.u32 [#allocation8], 4
      %s67 = int_to_ptr.vmem [resolvable:$true] %s66
      %72 = dma.hbm_to_vmem [thread:$0]  %s3, 256, %s67, [#allocation9], 128, 128, 8
    $region17: #{tpu_custom_call.1} parent=1 // pred_fallthru
      _
    // Predicated region
    $region18: #{tpu_custom_call.1} parent=1 // pred_check
      _
    $region19: #{tpu_custom_call.1} parent=1 // pred_check_branch
      %74 = sbr.rel (0) target = $region21
    $region20: #{tpu_custom_call.1} parent=1 // pred_region
      %s76 = ssub.s32 512, 512
      %77 = vsyncadd [#allocation9], %s76
      %s78 = sshll.u32 [#allocation10], 4
      %s79 = int_to_ptr.vmem [resolvable:$true] %s78
      %84 = dma.hbm_to_vmem [thread:$0]  %s4, 512, %s79, [#allocation9], 128, 128, 8
    $region21: #{tpu_custom_call.1} parent=1 // pred_fallthru
      _
    // Predicated region
    $region22: #{tpu_custom_call.1} parent=1 // pred_check
      _
    $region23: #{tpu_custom_call.1} parent=1 // pred_check_branch
      %86 = sbr.rel (0) target = $region25
    $region24: #{tpu_custom_call.1} parent=1 // pred_region
      %s88 = ssub.s32 512, 512
      %89 = vsyncadd [#allocation12], %s88
      %s90 = sshll.u32 [#allocation11], 4
      %s91 = int_to_ptr.vmem [resolvable:$true] %s90
      %96 = dma.hbm_to_vmem [thread:$0]  %s5, 512, %s91, [#allocation12], 128, 128, 8
    $region25: #{tpu_custom_call.1} parent=1 // pred_fallthru
      _
    // Predicated region
    $region26: #{tpu_custom_call.1} parent=1 // pred_check
      _
    $region27: #{tpu_custom_call.1} parent=1 // pred_check_branch
      %98 = sbr.rel (0) target = $region29
    $region28: #{tpu_custom_call.1} parent=1 // pred_region
      %s100 = ssub.s32 512, 512
      %101 = vsyncadd [#allocation12], %s100
      %s102 = sshll.u32 [#allocation13], 4
      %s103 = int_to_ptr.vmem [resolvable:$true] %s102
      %108 = dma.hbm_to_vmem [thread:$0]  %s6, 512, %s103, [#allocation12], 128, 128, 8
    $region29: #{tpu_custom_call.1} parent=1 // pred_fallthru
      _
    // Predicated region
    $region30: #{tpu_custom_call.1} parent=1 // pred_check
      _
    $region31: #{tpu_custom_call.1} parent=1 // pred_check_branch
      %110 = sbr.rel (0) target = $region33
    $region32: #{tpu_custom_call.1} parent=1 // pred_region
      _
    $region33: #{tpu_custom_call.1} parent=1 // pred_fallthru
      _
    // Predicated region
    $region34: #{tpu_custom_call.1} parent=1 // pred_check
      _
    $region35: #{tpu_custom_call.1} parent=1 // pred_check_branch
      %112 = sbr.rel (0) target = $region37
    $region36: #{tpu_custom_call.1} parent=1 // pred_region
      _
    $region37: #{tpu_custom_call.1} parent=1 // pred_fallthru
      _
    // Predicated region
    $region38: #{tpu_custom_call.1} parent=1 // pred_check
      _
    $region39: #{tpu_custom_call.1} parent=1 // pred_check_branch
      %114 = sbr.rel (0) target = $region41
    $region40: #{tpu_custom_call.1} parent=1 // pred_region
      _
    $region41: #{tpu_custom_call.1} parent=1 // pred_fallthru
      _
    // Predicated region
    $region42: #{tpu_custom_call.1} parent=1 // pred_check
      _
    $region43: #{tpu_custom_call.1} parent=1 // pred_check_branch
      %116 = sbr.rel (0) target = $region45
    $region44: #{tpu_custom_call.1} parent=1 // pred_region
      _
    $region45: #{tpu_custom_call.1} parent=1 // pred_fallthru
      _
    // Predicated region
    $region46: #{tpu_custom_call.1} parent=1 // pred_check
      _
    $region47: #{tpu_custom_call.1} parent=1 // pred_check_branch
      %118 = sbr.rel (0) target = $region49
    $region48: #{tpu_custom_call.1} parent=1 // pred_region
      _
    $region49: #{tpu_custom_call.1} parent=1 // pred_fallthru
      _
    // Predicated region
    $region50: #{tpu_custom_call.1} parent=1 // pred_check
      _
    $region51: #{tpu_custom_call.1} parent=1 // pred_check_branch
      %120 = sbr.rel (0) target = $region53
    $region52: #{tpu_custom_call.1} parent=1 // pred_region
      %121 = dma.done [#allocation3], 256
    $region53: #{tpu_custom_call.1} parent=1 // pred_fallthru
      _
    // Predicated region
    $region54: #{tpu_custom_call.1} parent=1 // pred_check
      _
    $region55: #{tpu_custom_call.1} parent=1 // pred_check_branch
      %123 = sbr.rel (0) target = $region57
    $region56: #{tpu_custom_call.1} parent=1 // pred_region
      %124 = dma.done [#allocation6], 256
    $region57: #{tpu_custom_call.1} parent=1 // pred_fallthru
      _
    // Predicated region
    $region58: #{tpu_custom_call.1} parent=1 // pred_check
      _
    $region59: #{tpu_custom_call.1} parent=1 // pred_check_branch
      %126 = sbr.rel (0) target = $region61
    $region60: #{tpu_custom_call.1} parent=1 // pred_region
      %127 = dma.done [#allocation6], 256
    $region61: #{tpu_custom_call.1} parent=1 // pred_fallthru
      _
    // Predicated region
    $region62: #{tpu_custom_call.1} parent=1 // pred_check
      _
    $region63: #{tpu_custom_call.1} parent=1 // pred_check_branch
      %129 = sbr.rel (0) target = $region65
    $region64: #{tpu_custom_call.1} parent=1 // pred_region
      %130 = dma.done [#allocation9], 256
    $region65: #{tpu_custom_call.1} parent=1 // pred_fallthru
      _
    // Predicated region
    $region66: #{tpu_custom_call.1} parent=1 // pred_check
      _
    $region67: #{tpu_custom_call.1} parent=1 // pred_check_branch
      %132 = sbr.rel (0) target = $region69
    $region68: #{tpu_custom_call.1} parent=1 // pred_region
      %133 = dma.done [#allocation9], 512
    $region69: #{tpu_custom_call.1} parent=1 // pred_fallthru
      _
    // Predicated region
    $region70: #{tpu_custom_call.1} parent=1 // pred_check
      _
    $region71: #{tpu_custom_call.1} parent=1 // pred_check_branch
      %135 = sbr.rel (0) target = $region73
    $region72: #{tpu_custom_call.1} parent=1 // pred_region
      %136 = dma.done [#allocation12], 512
    $region73: #{tpu_custom_call.1} parent=1 // pred_fallthru
      _
    // Predicated region
    $region74: #{tpu_custom_call.1} parent=1 // pred_check
      _
    $region75: #{tpu_custom_call.1} parent=1 // pred_check_branch
      %138 = sbr.rel (0) target = $region77
    $region76: #{tpu_custom_call.1} parent=1 // pred_region
      %139 = dma.done [#allocation12], 512
    $region77: #{tpu_custom_call.1} parent=1 // pred_fallthru
      _
    %v140 = vld [vmem:[#allocation2] sm:$0xff]
    %v141 = vld [vmem:[#allocation2 + $0x8] sm:$0xff]
    %v142 = vld [vmem:[#allocation5] sm:$0xff]
    %v143 = vld [vmem:[#allocation5 + $0x8] sm:$0xff]
    %v144 = vld [vmem:[#allocation7] sm:$0xff]
    %v145 = vld [vmem:[#allocation7 + $0x8] sm:$0xff]
    %v146 = vld [vmem:[#allocation10] sm:$0xff]
    %v147 = vld [vmem:[#allocation10 + $0x8] sm:$0xff]
    %v148 = vld [vmem:[#allocation10 + $0x10] sm:$0xff]
    %v149 = vld [vmem:[#allocation10 + $0x18] sm:$0xff]
    %v150 = vld [vmem:[%s7] sm:$0x1]
    %v152 = vlaneseq
    %v153 = vshrl.u32 %v152, 7
    %v154 = vsub.s32 0, %v153
    %v155 = vrot.slane %v150, %v154
    %vm157 = vcmask 261120
    %v159 = vsel %vm157, %v140, 0
    %v162 = vsel %vm157, %v141, 0
    %164 = vmatprep.subr.mxu0 0.0
    %165 = vmatpush1.msra.mxu0 %v146
    %166 = vmatprep.subr.mxu0 0.0
    %167 = vmatpush1.msra.mxu0 %v147
    %168 = vmatprep.subr.mxu0 0.0
    %169 = vmatpush1.msra.mxu0 %v148
    %170 = vmatprep.subr.mxu0 0.0
    %171 = vmatpush1.msra.mxu0 %v149
    %172 = vmatprep.subr.mxu0 0.0
    %173 = vmatpush1.msra.mxu0 0.0
    %174 = vmatprep.subr.mxu0 0.0
    %175 = vmatpush1.msra.mxu0 0.0
    %176 = vmatprep.subr.mxu0 0.0
    %177 = vmatpush1.msra.mxu0 0.0
    %178 = vmatprep.subr.mxu0 0.0
    %179 = vmatpush1.msra.mxu0 0.0
    %180 = vmatprep.subr.mxu0 0.0
    %181 = vmatpush1.msra.mxu0 0.0
    %182 = vmatprep.subr.mxu0 0.0
    %183 = vmatpush1.msra.mxu0 0.0
    %184 = vmatprep.subr.mxu0 0.0
    %185 = vmatpush1.msra.mxu0 0.0
    %186 = vmatprep.subr.mxu0 0.0
    %187 = vmatpush1.msra.mxu0 0.0
    %188 = vmatprep.subr.mxu0 0.0
    %189 = vmatpush1.msra.mxu0 0.0
    %190 = vmatprep.subr.mxu0 0.0
    %191 = vmatpush1.msra.mxu0 0.0
    %192 = vmatprep.subr.mxu0 0.0
    %193 = vmatpush1.msra.mxu0 0.0
    %194 = vmatprep.subr.mxu0 0.0
    %195 = vmatpush1.msra.mxu0 0.0
    %196 = vmatprep.subr.mxu0 0.0
    %197 = vmatpush1.msra.mxu0 0.0
    %198 = vmatprep.subr.mxu0 0.0
    %199 = vmatpush1.msra.mxu0 0.0
    %200 = vmatprep.subr.mxu0 0.0
    %201 = vmatpush1.msra.mxu0 0.0
    %202 = vmatprep.subr.mxu0 0.0
    %203 = vmatpush1.msra.mxu0 0.0
    %204 = vmatprep.subr.mxu0 0.0
    %205 = vmatpush1.msra.mxu0 0.0
    %206 = vmatprep.subr.mxu0 0.0
    %207 = vmatpush1.msra.mxu0 0.0
    %208 = vmatprep.subr.mxu0 0.0
    %209 = vmatpush1.msra.mxu0 0.0
    %210 = vmatprep.subr.mxu0 0.0
    %211 = vmatpush1.msra.mxu0 0.0
    %212 = vmatprep.subr.mxu0 0.0
    %213 = vmatpush1.msra.mxu0 0.0
    %214 = vmatprep.subr.mxu0 0.0
    %215 = vmatpush1.msra.mxu0 0.0
    %216 = vmatprep.subr.mxu0 0.0
    %217 = vmatpush1.msra.mxu0 0.0
    %218 = vmatprep.subr.mxu0 0.0
    %219 = vmatpush1.msra.mxu0 0.0
    %220 = vmatprep.subr.mxu0 0.0
    %221 = vmatpush1.msra.mxu0 0.0
    %222 = vmatprep.subr.mxu0 0.0
    %223 = vmatpush1.msra.mxu0 0.0
    %224 = vmatprep.subr.mxu0 0.0
    %225 = vmatpush1.msra.mxu0 0.0
    %226 = vmatprep.subr.mxu0 0.0
    %227 = vmatpush1.msra.mxu0 0.0
    %228 = vmatprep.mubr.f32.mxu0 0.0
    %229 = vmatmul.mubr.f32.gmra.mrb[0].mxu0 %v159
    %v230 = vpop.f32.mrb[0].mxu0
    %v231 = vadd.f32 %v155, %v230
    %v232 = vpop.f32.mrb[0].mxu0
    %233 = vmatprep.mubr.f32.mxu0 0.0
    %234 = vmatmul.mubr.f32.gmra.mrb[0].mxu0 %v162
    %v235 = vpop.f32.mrb[0].mxu0
    %v236 = vadd.f32 %v155, %v235
    %v237 = vpop.f32.mrb[0].mxu0
    %238 = vdwg.mxu0
    %v239 = vld [vmem:[#allocation11] sm:$0xff]
    %v240 = vld [vmem:[#allocation11 + $0x8] sm:$0xff]
    %v241 = vld [vmem:[#allocation11 + $0x10] sm:$0xff]
    %v242 = vld [vmem:[#allocation11 + $0x18] sm:$0xff]
    %v243 = vld [vmem:[%s8] sm:$0x1]
    %v245 = vlaneseq
    %v246 = vshrl.u32 %v245, 7
    %v247 = vsub.s32 0, %v246
    %v248 = vrot.slane %v243, %v247
    %v251 = vsel %vm157, %v142, 0
    %v254 = vsel %vm157, %v143, 0
    %256 = vmatprep.subr.mxu0 0.0
    %257 = vmatpush1.msra.mxu0 %v239
    %258 = vmatprep.subr.mxu0 0.0
    %259 = vmatpush1.msra.mxu0 %v240
    %260 = vmatprep.subr.mxu0 0.0
    %261 = vmatpush1.msra.mxu0 %v241
    %262 = vmatprep.subr.mxu0 0.0
    %263 = vmatpush1.msra.mxu0 %v242
    %264 = vmatprep.subr.mxu0 0.0
    %265 = vmatpush1.msra.mxu0 0.0
    %266 = vmatprep.subr.mxu0 0.0
    %267 = vmatpush1.msra.mxu0 0.0
    %268 = vmatprep.subr.mxu0 0.0
    %269 = vmatpush1.msra.mxu0 0.0
    %270 = vmatprep.subr.mxu0 0.0
    %271 = vmatpush1.msra.mxu0 0.0
    %272 = vmatprep.subr.mxu0 0.0
    %273 = vmatpush1.msra.mxu0 0.0
    %274 = vmatprep.subr.mxu0 0.0
    %275 = vmatpush1.msra.mxu0 0.0
    %276 = vmatprep.subr.mxu0 0.0
    %277 = vmatpush1.msra.mxu0 0.0
    %278 = vmatprep.subr.mxu0 0.0
    %279 = vmatpush1.msra.mxu0 0.0
    %280 = vmatprep.subr.mxu0 0.0
    %281 = vmatpush1.msra.mxu0 0.0
    %282 = vmatprep.subr.mxu0 0.0
    %283 = vmatpush1.msra.mxu0 0.0
    %284 = vmatprep.subr.mxu0 0.0
    %285 = vmatpush1.msra.mxu0 0.0
    %286 = vmatprep.subr.mxu0 0.0
    %287 = vmatpush1.msra.mxu0 0.0
    %288 = vmatprep.subr.mxu0 0.0
    %289 = vmatpush1.msra.mxu0 0.0
    %290 = vmatprep.subr.mxu0 0.0
    %291 = vmatpush1.msra.mxu0 0.0
    %292 = vmatprep.subr.mxu0 0.0
    %293 = vmatpush1.msra.mxu0 0.0
    %294 = vmatprep.subr.mxu0 0.0
    %295 = vmatpush1.msra.mxu0 0.0
    %296 = vmatprep.subr.mxu0 0.0
    %297 = vmatpush1.msra.mxu0 0.0
    %298 = vmatprep.subr.mxu0 0.0
    %299 = vmatpush1.msra.mxu0 0.0
    %300 = vmatprep.subr.mxu0 0.0
    %301 = vmatpush1.msra.mxu0 0.0
    %302 = vmatprep.subr.mxu0 0.0
    %303 = vmatpush1.msra.mxu0 0.0
    %304 = vmatprep.subr.mxu0 0.0
    %305 = vmatpush1.msra.mxu0 0.0
    %306 = vmatprep.subr.mxu0 0.0
    %307 = vmatpush1.msra.mxu0 0.0
    %308 = vmatprep.subr.mxu0 0.0
    %309 = vmatpush1.msra.mxu0 0.0
    %310 = vmatprep.subr.mxu0 0.0
    %311 = vmatpush1.msra.mxu0 0.0
    %312 = vmatprep.subr.mxu0 0.0
    %313 = vmatpush1.msra.mxu0 0.0
    %314 = vmatprep.subr.mxu0 0.0
    %315 = vmatpush1.msra.mxu0 0.0
    %316 = vmatprep.subr.mxu0 0.0
    %317 = vmatpush1.msra.mxu0 0.0
    %318 = vmatprep.subr.mxu0 0.0
    %319 = vmatpush1.msra.mxu0 0.0
    %320 = vmatprep.mubr.f32.mxu0 0.0
    %321 = vmatmul.mubr.f32.gmra.mrb[0].mxu0 %v251
    %v322 = vpop.f32.mrb[0].mxu0
    %v323 = vadd.f32 %v248, %v322
    %v324 = vpop.f32.mrb[0].mxu0
    %325 = vmatprep.mubr.f32.mxu0 0.0
    %326 = vmatmul.mubr.f32.gmra.mrb[0].mxu0 %v254
    %v327 = vpop.f32.mrb[0].mxu0
    %v328 = vadd.f32 %v248, %v327
    %v329 = vpop.f32.mrb[0].mxu0
    %330 = vdwg.mxu0
    %v331 = vld [vmem:[#allocation13] sm:$0xff]
    %v332 = vld [vmem:[#allocation13 + $0x8] sm:$0xff]
    %v333 = vld [vmem:[#allocation13 + $0x10] sm:$0xff]
    %v334 = vld [vmem:[#allocation13 + $0x18] sm:$0xff]
    %v335 = vld [vmem:[%s9] sm:$0x1]
    %v337 = vlaneseq
    %v338 = vshrl.u32 %v337, 7
    %v339 = vsub.s32 0, %v338
    %v340 = vrot.slane %v335, %v339
    %v343 = vsel %vm157, %v144, 0
    %v346 = vsel %vm157, %v145, 0
    %348 = vmatprep.subr.mxu0 0.0
    %349 = vmatpush1.msra.mxu0 %v331
    %350 = vmatprep.subr.mxu0 0.0
    %351 = vmatpush1.msra.mxu0 %v332
    %352 = vmatprep.subr.mxu0 0.0
    %353 = vmatpush1.msra.mxu0 %v333
    %354 = vmatprep.subr.mxu0 0.0
    %355 = vmatpush1.msra.mxu0 %v334
    %356 = vmatprep.subr.mxu0 0.0
    %357 = vmatpush1.msra.mxu0 0.0
    %358 = vmatprep.subr.mxu0 0.0
    %359 = vmatpush1.msra.mxu0 0.0
    %360 = vmatprep.subr.mxu0 0.0
    %361 = vmatpush1.msra.mxu0 0.0
    %362 = vmatprep.subr.mxu0 0.0
    %363 = vmatpush1.msra.mxu0 0.0
    %364 = vmatprep.subr.mxu0 0.0
    %365 = vmatpush1.msra.mxu0 0.0
    %366 = vmatprep.subr.mxu0 0.0
    %367 = vmatpush1.msra.mxu0 0.0
    %368 = vmatprep.subr.mxu0 0.0
    %369 = vmatpush1.msra.mxu0 0.0
    %370 = vmatprep.subr.mxu0 0.0
    %371 = vmatpush1.msra.mxu0 0.0
    %372 = vmatprep.subr.mxu0 0.0
    %373 = vmatpush1.msra.mxu0 0.0
    %374 = vmatprep.subr.mxu0 0.0
    %375 = vmatpush1.msra.mxu0 0.0
    %376 = vmatprep.subr.mxu0 0.0
    %377 = vmatpush1.msra.mxu0 0.0
    %378 = vmatprep.subr.mxu0 0.0
    %379 = vmatpush1.msra.mxu0 0.0
    %380 = vmatprep.subr.mxu0 0.0
    %381 = vmatpush1.msra.mxu0 0.0
    %382 = vmatprep.subr.mxu0 0.0
    %383 = vmatpush1.msra.mxu0 0.0
    %384 = vmatprep.subr.mxu0 0.0
    %385 = vmatpush1.msra.mxu0 0.0
    %386 = vmatprep.subr.mxu0 0.0
    %387 = vmatpush1.msra.mxu0 0.0
    %388 = vmatprep.subr.mxu0 0.0
    %389 = vmatpush1.msra.mxu0 0.0
    %390 = vmatprep.subr.mxu0 0.0
    %391 = vmatpush1.msra.mxu0 0.0
    %392 = vmatprep.subr.mxu0 0.0
    %393 = vmatpush1.msra.mxu0 0.0
    %394 = vmatprep.subr.mxu0 0.0
    %395 = vmatpush1.msra.mxu0 0.0
    %396 = vmatprep.subr.mxu0 0.0
    %397 = vmatpush1.msra.mxu0 0.0
    %398 = vmatprep.subr.mxu0 0.0
    %399 = vmatpush1.msra.mxu0 0.0
    %400 = vmatprep.subr.mxu0 0.0
    %401 = vmatpush1.msra.mxu0 0.0
    %402 = vmatprep.subr.mxu0 0.0
    %403 = vmatpush1.msra.mxu0 0.0
    %404 = vmatprep.subr.mxu0 0.0
    %405 = vmatpush1.msra.mxu0 0.0
    %406 = vmatprep.subr.mxu0 0.0
    %407 = vmatpush1.msra.mxu0 0.0
    %408 = vmatprep.subr.mxu0 0.0
    %409 = vmatpush1.msra.mxu0 0.0
    %410 = vmatprep.subr.mxu0 0.0
    %411 = vmatpush1.msra.mxu0 0.0
    %412 = vmatprep.mubr.f32.mxu0 0.0
    %413 = vmatmul.mubr.f32.gmra.mrb[0].mxu0 %v343
    %v414 = vpop.f32.mrb[0].mxu0
    %v415 = vadd.f32 %v340, %v414
    %v416 = vpop.f32.mrb[0].mxu0
    %417 = vmatprep.mubr.f32.mxu0 0.0
    %418 = vmatmul.mubr.f32.gmra.mrb[0].mxu0 %v346
    %v419 = vpop.f32.mrb[0].mxu0
    %v420 = vadd.f32 %v340, %v419
    %v421 = vpop.f32.mrb[0].mxu0
    %422 = vdwg.mxu0
    %425 = vrot.lane.b32.xlu0 %v231, 120
    %v426 = vpop.permute.xlu0 %425
    %427 = vrot.lane.b32.xlu0 %v236, 120
    %v428 = vpop.permute.xlu0 %427
    %429 = vrot.lane.b32.xlu0 %v231, 112
    %v430 = vpop.permute.xlu0 %429
    %431 = vrot.lane.b32.xlu0 %v236, 112
    %v432 = vpop.permute.xlu0 %431
    %433 = vrot.lane.b32.xlu0 %v231, 104
    %v434 = vpop.permute.xlu0 %433
    %435 = vrot.lane.b32.xlu0 %v236, 104
    %v436 = vpop.permute.xlu0 %435
    %439 = vrot.lane.b32.xlu0 %v323, 120
    %v440 = vpop.permute.xlu0 %439
    %441 = vrot.lane.b32.xlu0 %v328, 120
    %v442 = vpop.permute.xlu0 %441
    %443 = vrot.lane.b32.xlu0 %v323, 112
    %v444 = vpop.permute.xlu0 %443
    %445 = vrot.lane.b32.xlu0 %v328, 112
    %v446 = vpop.permute.xlu0 %445
    %447 = vrot.lane.b32.xlu0 %v323, 104
    %v448 = vpop.permute.xlu0 %447
    %449 = vrot.lane.b32.xlu0 %v328, 104
    %v450 = vpop.permute.xlu0 %449
    %453 = vrot.lane.b32.xlu0 %v415, 120
    %v454 = vpop.permute.xlu0 %453
    %455 = vrot.lane.b32.xlu0 %v420, 120
    %v456 = vpop.permute.xlu0 %455
    %459 = vrot.lane.b32.xlu0 %v415, 112
    %v460 = vpop.permute.xlu0 %459
    %461 = vrot.lane.b32.xlu0 %v420, 112
    %v462 = vpop.permute.xlu0 %461
    %465 = vrot.lane.b32.xlu0 %v415, 104
    %v466 = vpop.permute.xlu0 %465
    %467 = vrot.lane.b32.xlu0 %v420, 104
    %v468 = vpop.permute.xlu0 %467
    %vm471 = vcmask 64512
    %v472 = vsel %vm471, %v231, 0
    %v474 = vsel %vm471, %v323, 0
    %476 = vmatprep.subr.mxu0 0.0
    %477 = vmatpush1.xpose.msra.mxu0 %v474
    %478 = vmatprep.subr.mxu0 0.0
    %479 = vmatpush1.xpose.msra.mxu0 0.0
    %480 = vmatprep.subr.mxu0 0.0
    %481 = vmatpush1.xpose.msra.mxu0 0.0
    %482 = vmatprep.subr.mxu0 0.0
    %483 = vmatpush1.xpose.msra.mxu0 0.0
    %484 = vmatprep.subr.mxu0 0.0
    %485 = vmatpush1.xpose.msra.mxu0 0.0
    %486 = vmatprep.subr.mxu0 0.0
    %487 = vmatpush1.xpose.msra.mxu0 0.0
    %488 = vmatprep.subr.mxu0 0.0
    %489 = vmatpush1.xpose.msra.mxu0 0.0
    %490 = vmatprep.subr.mxu0 0.0
    %491 = vmatpush1.xpose.msra.mxu0 0.0
    %492 = vmatprep.subr.mxu0 0.0
    %493 = vmatpush1.xpose.msra.mxu0 0.0
    %494 = vmatprep.subr.mxu0 0.0
    %495 = vmatpush1.xpose.msra.mxu0 0.0
    %496 = vmatprep.subr.mxu0 0.0
    %497 = vmatpush1.xpose.msra.mxu0 0.0
    %498 = vmatprep.subr.mxu0 0.0
    %499 = vmatpush1.xpose.msra.mxu0 0.0
    %500 = vmatprep.subr.mxu0 0.0
    %501 = vmatpush1.xpose.msra.mxu0 0.0
    %502 = vmatprep.subr.mxu0 0.0
    %503 = vmatpush1.xpose.msra.mxu0 0.0
    %504 = vmatprep.subr.mxu0 0.0
    %505 = vmatpush1.xpose.msra.mxu0 0.0
    %506 = vmatprep.subr.mxu0 0.0
    %507 = vmatpush1.xpose.msra.mxu0 0.0
    %508 = vmatprep.subr.mxu0 0.0
    %509 = vmatpush1.xpose.msra.mxu0 0.0
    %510 = vmatprep.subr.mxu0 0.0
    %511 = vmatpush1.xpose.msra.mxu0 0.0
    %512 = vmatprep.subr.mxu0 0.0
    %513 = vmatpush1.xpose.msra.mxu0 0.0
    %514 = vmatprep.subr.mxu0 0.0
    %515 = vmatpush1.xpose.msra.mxu0 0.0
    %516 = vmatprep.subr.mxu0 0.0
    %517 = vmatpush1.xpose.msra.mxu0 0.0
    %518 = vmatprep.subr.mxu0 0.0
    %519 = vmatpush1.xpose.msra.mxu0 0.0
    %520 = vmatprep.subr.mxu0 0.0
    %521 = vmatpush1.xpose.msra.mxu0 0.0
    %522 = vmatprep.subr.mxu0 0.0
    %523 = vmatpush1.xpose.msra.mxu0 0.0
    %524 = vmatprep.subr.mxu0 0.0
    %525 = vmatpush1.xpose.msra.mxu0 0.0
    %526 = vmatprep.subr.mxu0 0.0
    %527 = vmatpush1.xpose.msra.mxu0 0.0
    %528 = vmatprep.subr.mxu0 0.0
    %529 = vmatpush1.xpose.msra.mxu0 0.0
    %530 = vmatprep.subr.mxu0 0.0
    %531 = vmatpush1.xpose.msra.mxu0 0.0
    %532 = vmatprep.subr.mxu0 0.0
    %533 = vmatpush1.xpose.msra.mxu0 0.0
    %534 = vmatprep.subr.mxu0 0.0
    %535 = vmatpush1.xpose.msra.mxu0 0.0
    %536 = vmatprep.subr.mxu0 0.0
    %537 = vmatpush1.xpose.msra.mxu0 0.0
    %538 = vmatprep.subr.mxu0 0.0
    %539 = vmatpush1.xpose.msra.mxu0 0.0
    %540 = vmatprep.mubr.f32.mxu0 0.0
    %541 = vmatmul.mubr.f32.gmra.mrb[0].mxu0 %v472
    %v542 = vpop.f32.mrb[0].mxu0
    %v543 = vadd.f32 0.0, %v542
    %v544 = vpop.f32.mrb[0].mxu0
    %545 = vdwg.mxu0
    %v546 = vsel %vm471, %v426, 0
    %v548 = vsel %vm471, %v440, 0
    %550 = vmatprep.subr.mxu0 0.0
    %551 = vmatpush1.xpose.msra.mxu0 %v548
    %552 = vmatprep.subr.mxu0 0.0
    %553 = vmatpush1.xpose.msra.mxu0 0.0
    %554 = vmatprep.subr.mxu0 0.0
    %555 = vmatpush1.xpose.msra.mxu0 0.0
    %556 = vmatprep.subr.mxu0 0.0
    %557 = vmatpush1.xpose.msra.mxu0 0.0
    %558 = vmatprep.subr.mxu0 0.0
    %559 = vmatpush1.xpose.msra.mxu0 0.0
    %560 = vmatprep.subr.mxu0 0.0
    %561 = vmatpush1.xpose.msra.mxu0 0.0
    %562 = vmatprep.subr.mxu0 0.0
    %563 = vmatpush1.xpose.msra.mxu0 0.0
    %564 = vmatprep.subr.mxu0 0.0
    %565 = vmatpush1.xpose.msra.mxu0 0.0
    %566 = vmatprep.subr.mxu0 0.0
    %567 = vmatpush1.xpose.msra.mxu0 0.0
    %568 = vmatprep.subr.mxu0 0.0
    %569 = vmatpush1.xpose.msra.mxu0 0.0
    %570 = vmatprep.subr.mxu0 0.0
    %571 = vmatpush1.xpose.msra.mxu0 0.0
    %572 = vmatprep.subr.mxu0 0.0
    %573 = vmatpush1.xpose.msra.mxu0 0.0
    %574 = vmatprep.subr.mxu0 0.0
    %575 = vmatpush1.xpose.msra.mxu0 0.0
    %576 = vmatprep.subr.mxu0 0.0
    %577 = vmatpush1.xpose.msra.mxu0 0.0
    %578 = vmatprep.subr.mxu0 0.0
    %579 = vmatpush1.xpose.msra.mxu0 0.0
    %580 = vmatprep.subr.mxu0 0.0
    %581 = vmatpush1.xpose.msra.mxu0 0.0
    %582 = vmatprep.subr.mxu0 0.0
    %583 = vmatpush1.xpose.msra.mxu0 0.0
    %584 = vmatprep.subr.mxu0 0.0
    %585 = vmatpush1.xpose.msra.mxu0 0.0
    %586 = vmatprep.subr.mxu0 0.0
    %587 = vmatpush1.xpose.msra.mxu0 0.0
    %588 = vmatprep.subr.mxu0 0.0
    %589 = vmatpush1.xpose.msra.mxu0 0.0
    %590 = vmatprep.subr.mxu0 0.0
    %591 = vmatpush1.xpose.msra.mxu0 0.0
    %592 = vmatprep.subr.mxu0 0.0
    %593 = vmatpush1.xpose.msra.mxu0 0.0
    %594 = vmatprep.subr.mxu0 0.0
    %595 = vmatpush1.xpose.msra.mxu0 0.0
    %596 = vmatprep.subr.mxu0 0.0
    %597 = vmatpush1.xpose.msra.mxu0 0.0
    %598 = vmatprep.subr.mxu0 0.0
    %599 = vmatpush1.xpose.msra.mxu0 0.0
    %600 = vmatprep.subr.mxu0 0.0
    %601 = vmatpush1.xpose.msra.mxu0 0.0
    %602 = vmatprep.subr.mxu0 0.0
    %603 = vmatpush1.xpose.msra.mxu0 0.0
    %604 = vmatprep.subr.mxu0 0.0
    %605 = vmatpush1.xpose.msra.mxu0 0.0
    %606 = vmatprep.subr.mxu0 0.0
    %607 = vmatpush1.xpose.msra.mxu0 0.0
    %608 = vmatprep.subr.mxu0 0.0
    %609 = vmatpush1.xpose.msra.mxu0 0.0
    %610 = vmatprep.subr.mxu0 0.0
    %611 = vmatpush1.xpose.msra.mxu0 0.0
    %612 = vmatprep.subr.mxu0 0.0
    %613 = vmatpush1.xpose.msra.mxu0 0.0
    %614 = vmatprep.mubr.f32.mxu0 0.0
    %615 = vmatmul.mubr.f32.gmra.mrb[0].mxu0 %v546
    %v616 = vpop.f32.mrb[0].mxu0
    %v617 = vadd.f32 0.0, %v616
    %v618 = vpop.f32.mrb[0].mxu0
    %619 = vdwg.mxu0
    %v620 = vsel %vm471, %v430, 0
    %v622 = vsel %vm471, %v444, 0
    %624 = vmatprep.subr.mxu0 0.0
    %625 = vmatpush1.xpose.msra.mxu0 %v622
    %626 = vmatprep.subr.mxu0 0.0
    %627 = vmatpush1.xpose.msra.mxu0 0.0
    %628 = vmatprep.subr.mxu0 0.0
    %629 = vmatpush1.xpose.msra.mxu0 0.0
    %630 = vmatprep.subr.mxu0 0.0
    %631 = vmatpush1.xpose.msra.mxu0 0.0
    %632 = vmatprep.subr.mxu0 0.0
    %633 = vmatpush1.xpose.msra.mxu0 0.0
    %634 = vmatprep.subr.mxu0 0.0
    %635 = vmatpush1.xpose.msra.mxu0 0.0
    %636 = vmatprep.subr.mxu0 0.0
    %637 = vmatpush1.xpose.msra.mxu0 0.0
    %638 = vmatprep.subr.mxu0 0.0
    %639 = vmatpush1.xpose.msra.mxu0 0.0
    %640 = vmatprep.subr.mxu0 0.0
    %641 = vmatpush1.xpose.msra.mxu0 0.0
    %642 = vmatprep.subr.mxu0 0.0
    %643 = vmatpush1.xpose.msra.mxu0 0.0
    %644 = vmatprep.subr.mxu0 0.0
    %645 = vmatpush1.xpose.msra.mxu0 0.0
    %646 = vmatprep.subr.mxu0 0.0
    %647 = vmatpush1.xpose.msra.mxu0 0.0
    %648 = vmatprep.subr.mxu0 0.0
    %649 = vmatpush1.xpose.msra.mxu0 0.0
    %650 = vmatprep.subr.mxu0 0.0
    %651 = vmatpush1.xpose.msra.mxu0 0.0
    %652 = vmatprep.subr.mxu0 0.0
    %653 = vmatpush1.xpose.msra.mxu0 0.0
    %654 = vmatprep.subr.mxu0 0.0
    %655 = vmatpush1.xpose.msra.mxu0 0.0
    %656 = vmatprep.subr.mxu0 0.0
    %657 = vmatpush1.xpose.msra.mxu0 0.0
    %658 = vmatprep.subr.mxu0 0.0
    %659 = vmatpush1.xpose.msra.mxu0 0.0
    %660 = vmatprep.subr.mxu0 0.0
    %661 = vmatpush1.xpose.msra.mxu0 0.0
    %662 = vmatprep.subr.mxu0 0.0
    %663 = vmatpush1.xpose.msra.mxu0 0.0
    %664 = vmatprep.subr.mxu0 0.0
    %665 = vmatpush1.xpose.msra.mxu0 0.0
    %666 = vmatprep.subr.mxu0 0.0
    %667 = vmatpush1.xpose.msra.mxu0 0.0
    %668 = vmatprep.subr.mxu0 0.0
    %669 = vmatpush1.xpose.msra.mxu0 0.0
    %670 = vmatprep.subr.mxu0 0.0
    %671 = vmatpush1.xpose.msra.mxu0 0.0
    %672 = vmatprep.subr.mxu0 0.0
    %673 = vmatpush1.xpose.msra.mxu0 0.0
    %674 = vmatprep.subr.mxu0 0.0
    %675 = vmatpush1.xpose.msra.mxu0 0.0
    %676 = vmatprep.subr.mxu0 0.0
    %677 = vmatpush1.xpose.msra.mxu0 0.0
    %678 = vmatprep.subr.mxu0 0.0
    %679 = vmatpush1.xpose.msra.mxu0 0.0
    %680 = vmatprep.subr.mxu0 0.0
    %681 = vmatpush1.xpose.msra.mxu0 0.0
    %682 = vmatprep.subr.mxu0 0.0
    %683 = vmatpush1.xpose.msra.mxu0 0.0
    %684 = vmatprep.subr.mxu0 0.0
    %685 = vmatpush1.xpose.msra.mxu0 0.0
    %686 = vmatprep.subr.mxu0 0.0
    %687 = vmatpush1.xpose.msra.mxu0 0.0
    %688 = vmatprep.mubr.f32.mxu0 0.0
    %689 = vmatmul.mubr.f32.gmra.mrb[0].mxu0 %v620
    %v690 = vpop.f32.mrb[0].mxu0
    %v691 = vadd.f32 0.0, %v690
    %v692 = vpop.f32.mrb[0].mxu0
    %693 = vdwg.mxu0
    %v694 = vsel %vm471, %v434, 0
    %v696 = vsel %vm471, %v448, 0
    %698 = vmatprep.subr.mxu0 0.0
    %699 = vmatpush1.xpose.msra.mxu0 %v696
    %700 = vmatprep.subr.mxu0 0.0
    %701 = vmatpush1.xpose.msra.mxu0 0.0
    %702 = vmatprep.subr.mxu0 0.0
    %703 = vmatpush1.xpose.msra.mxu0 0.0
    %704 = vmatprep.subr.mxu0 0.0
    %705 = vmatpush1.xpose.msra.mxu0 0.0
    %706 = vmatprep.subr.mxu0 0.0
    %707 = vmatpush1.xpose.msra.mxu0 0.0
    %708 = vmatprep.subr.mxu0 0.0
    %709 = vmatpush1.xpose.msra.mxu0 0.0
    %710 = vmatprep.subr.mxu0 0.0
    %711 = vmatpush1.xpose.msra.mxu0 0.0
    %712 = vmatprep.subr.mxu0 0.0
    %713 = vmatpush1.xpose.msra.mxu0 0.0
    %714 = vmatprep.subr.mxu0 0.0
    %715 = vmatpush1.xpose.msra.mxu0 0.0
    %716 = vmatprep.subr.mxu0 0.0
    %717 = vmatpush1.xpose.msra.mxu0 0.0
    %718 = vmatprep.subr.mxu0 0.0
    %719 = vmatpush1.xpose.msra.mxu0 0.0
    %720 = vmatprep.subr.mxu0 0.0
    %721 = vmatpush1.xpose.msra.mxu0 0.0
    %722 = vmatprep.subr.mxu0 0.0
    %723 = vmatpush1.xpose.msra.mxu0 0.0
    %724 = vmatprep.subr.mxu0 0.0
    %725 = vmatpush1.xpose.msra.mxu0 0.0
    %726 = vmatprep.subr.mxu0 0.0
    %727 = vmatpush1.xpose.msra.mxu0 0.0
    %728 = vmatprep.subr.mxu0 0.0
    %729 = vmatpush1.xpose.msra.mxu0 0.0
    %730 = vmatprep.subr.mxu0 0.0
    %731 = vmatpush1.xpose.msra.mxu0 0.0
    %732 = vmatprep.subr.mxu0 0.0
    %733 = vmatpush1.xpose.msra.mxu0 0.0
    %734 = vmatprep.subr.mxu0 0.0
    %735 = vmatpush1.xpose.msra.mxu0 0.0
    %736 = vmatprep.subr.mxu0 0.0
    %737 = vmatpush1.xpose.msra.mxu0 0.0
    %738 = vmatprep.subr.mxu0 0.0
    %739 = vmatpush1.xpose.msra.mxu0 0.0
    %740 = vmatprep.subr.mxu0 0.0
    %741 = vmatpush1.xpose.msra.mxu0 0.0
    %742 = vmatprep.subr.mxu0 0.0
    %743 = vmatpush1.xpose.msra.mxu0 0.0
    %744 = vmatprep.subr.mxu0 0.0
    %745 = vmatpush1.xpose.msra.mxu0 0.0
    %746 = vmatprep.subr.mxu0 0.0
    %747 = vmatpush1.xpose.msra.mxu0 0.0
    %748 = vmatprep.subr.mxu0 0.0
    %749 = vmatpush1.xpose.msra.mxu0 0.0
    %750 = vmatprep.subr.mxu0 0.0
    %751 = vmatpush1.xpose.msra.mxu0 0.0
    %752 = vmatprep.subr.mxu0 0.0
    %753 = vmatpush1.xpose.msra.mxu0 0.0
    %754 = vmatprep.subr.mxu0 0.0
    %755 = vmatpush1.xpose.msra.mxu0 0.0
    %756 = vmatprep.subr.mxu0 0.0
    %757 = vmatpush1.xpose.msra.mxu0 0.0
    %758 = vmatprep.subr.mxu0 0.0
    %759 = vmatpush1.xpose.msra.mxu0 0.0
    %760 = vmatprep.subr.mxu0 0.0
    %761 = vmatpush1.xpose.msra.mxu0 0.0
    %762 = vmatprep.mubr.f32.mxu0 0.0
    %763 = vmatmul.mubr.f32.gmra.mrb[0].mxu0 %v694
    %v764 = vpop.f32.mrb[0].mxu0
    %v765 = vadd.f32 0.0, %v764
    %v766 = vpop.f32.mrb[0].mxu0
    %767 = vdwg.mxu0
    %v768 = vsel %vm471, %v236, 0
    %v770 = vsel %vm471, %v328, 0
    %772 = vmatprep.subr.mxu0 0.0
    %773 = vmatpush1.xpose.msra.mxu0 %v770
    %774 = vmatprep.subr.mxu0 0.0
    %775 = vmatpush1.xpose.msra.mxu0 0.0
    %776 = vmatprep.subr.mxu0 0.0
    %777 = vmatpush1.xpose.msra.mxu0 0.0
    %778 = vmatprep.subr.mxu0 0.0
    %779 = vmatpush1.xpose.msra.mxu0 0.0
    %780 = vmatprep.subr.mxu0 0.0
    %781 = vmatpush1.xpose.msra.mxu0 0.0
    %782 = vmatprep.subr.mxu0 0.0
    %783 = vmatpush1.xpose.msra.mxu0 0.0
    %784 = vmatprep.subr.mxu0 0.0
    %785 = vmatpush1.xpose.msra.mxu0 0.0
    %786 = vmatprep.subr.mxu0 0.0
    %787 = vmatpush1.xpose.msra.mxu0 0.0
    %788 = vmatprep.subr.mxu0 0.0
    %789 = vmatpush1.xpose.msra.mxu0 0.0
    %790 = vmatprep.subr.mxu0 0.0
    %791 = vmatpush1.xpose.msra.mxu0 0.0
    %792 = vmatprep.subr.mxu0 0.0
    %793 = vmatpush1.xpose.msra.mxu0 0.0
    %794 = vmatprep.subr.mxu0 0.0
    %795 = vmatpush1.xpose.msra.mxu0 0.0
    %796 = vmatprep.subr.mxu0 0.0
    %797 = vmatpush1.xpose.msra.mxu0 0.0
    %798 = vmatprep.subr.mxu0 0.0
    %799 = vmatpush1.xpose.msra.mxu0 0.0
    %800 = vmatprep.subr.mxu0 0.0
    %801 = vmatpush1.xpose.msra.mxu0 0.0
    %802 = vmatprep.subr.mxu0 0.0
    %803 = vmatpush1.xpose.msra.mxu0 0.0
    %804 = vmatprep.subr.mxu0 0.0
    %805 = vmatpush1.xpose.msra.mxu0 0.0
    %806 = vmatprep.subr.mxu0 0.0
    %807 = vmatpush1.xpose.msra.mxu0 0.0
    %808 = vmatprep.subr.mxu0 0.0
    %809 = vmatpush1.xpose.msra.mxu0 0.0
    %810 = vmatprep.subr.mxu0 0.0
    %811 = vmatpush1.xpose.msra.mxu0 0.0
    %812 = vmatprep.subr.mxu0 0.0
    %813 = vmatpush1.xpose.msra.mxu0 0.0
    %814 = vmatprep.subr.mxu0 0.0
    %815 = vmatpush1.xpose.msra.mxu0 0.0
    %816 = vmatprep.subr.mxu0 0.0
    %817 = vmatpush1.xpose.msra.mxu0 0.0
    %818 = vmatprep.subr.mxu0 0.0
    %819 = vmatpush1.xpose.msra.mxu0 0.0
    %820 = vmatprep.subr.mxu0 0.0
    %821 = vmatpush1.xpose.msra.mxu0 0.0
    %822 = vmatprep.subr.mxu0 0.0
    %823 = vmatpush1.xpose.msra.mxu0 0.0
    %824 = vmatprep.subr.mxu0 0.0
    %825 = vmatpush1.xpose.msra.mxu0 0.0
    %826 = vmatprep.subr.mxu0 0.0
    %827 = vmatpush1.xpose.msra.mxu0 0.0
    %828 = vmatprep.subr.mxu0 0.0
    %829 = vmatpush1.xpose.msra.mxu0 0.0
    %830 = vmatprep.subr.mxu0 0.0
    %831 = vmatpush1.xpose.msra.mxu0 0.0
    %832 = vmatprep.subr.mxu0 0.0
    %833 = vmatpush1.xpose.msra.mxu0 0.0
    %834 = vmatprep.subr.mxu0 0.0
    %835 = vmatpush1.xpose.msra.mxu0 0.0
    %836 = vmatprep.mubr.f32.mxu0 0.0
    %837 = vmatmul.mubr.f32.gmra.mrb[0].mxu0 %v768
    %v838 = vpop.f32.mrb[0].mxu0
    %v839 = vadd.f32 0.0, %v838
    %v840 = vpop.f32.mrb[0].mxu0
    %841 = vdwg.mxu0
    %v842 = vsel %vm471, %v428, 0
    %v844 = vsel %vm471, %v442, 0
    %846 = vmatprep.subr.mxu0 0.0
    %847 = vmatpush1.xpose.msra.mxu0 %v844
    %848 = vmatprep.subr.mxu0 0.0
    %849 = vmatpush1.xpose.msra.mxu0 0.0
    %850 = vmatprep.subr.mxu0 0.0
    %851 = vmatpush1.xpose.msra.mxu0 0.0
    %852 = vmatprep.subr.mxu0 0.0
    %853 = vmatpush1.xpose.msra.mxu0 0.0
    %854 = vmatprep.subr.mxu0 0.0
    %855 = vmatpush1.xpose.msra.mxu0 0.0
    %856 = vmatprep.subr.mxu0 0.0
    %857 = vmatpush1.xpose.msra.mxu0 0.0
    %858 = vmatprep.subr.mxu0 0.0
    %859 = vmatpush1.xpose.msra.mxu0 0.0
    %860 = vmatprep.subr.mxu0 0.0
    %861 = vmatpush1.xpose.msra.mxu0 0.0
    %862 = vmatprep.subr.mxu0 0.0
    %863 = vmatpush1.xpose.msra.mxu0 0.0
    %864 = vmatprep.subr.mxu0 0.0
    %865 = vmatpush1.xpose.msra.mxu0 0.0
    %866 = vmatprep.subr.mxu0 0.0
    %867 = vmatpush1.xpose.msra.mxu0 0.0
    %868 = vmatprep.subr.mxu0 0.0
    %869 = vmatpush1.xpose.msra.mxu0 0.0
    %870 = vmatprep.subr.mxu0 0.0
    %871 = vmatpush1.xpose.msra.mxu0 0.0
    %872 = vmatprep.subr.mxu0 0.0
    %873 = vmatpush1.xpose.msra.mxu0 0.0
    %874 = vmatprep.subr.mxu0 0.0
    %875 = vmatpush1.xpose.msra.mxu0 0.0
    %876 = vmatprep.subr.mxu0 0.0
    %877 = vmatpush1.xpose.msra.mxu0 0.0
    %878 = vmatprep.subr.mxu0 0.0
    %879 = vmatpush1.xpose.msra.mxu0 0.0
    %880 = vmatprep.subr.mxu0 0.0
    %881 = vmatpush1.xpose.msra.mxu0 0.0
    %882 = vmatprep.subr.mxu0 0.0
    %883 = vmatpush1.xpose.msra.mxu0 0.0
    %884 = vmatprep.subr.mxu0 0.0
    %885 = vmatpush1.xpose.msra.mxu0 0.0
    %886 = vmatprep.subr.mxu0 0.0
    %887 = vmatpush1.xpose.msra.mxu0 0.0
    %888 = vmatprep.subr.mxu0 0.0
    %889 = vmatpush1.xpose.msra.mxu0 0.0
    %890 = vmatprep.subr.mxu0 0.0
    %891 = vmatpush1.xpose.msra.mxu0 0.0
    %892 = vmatprep.subr.mxu0 0.0
    %893 = vmatpush1.xpose.msra.mxu0 0.0
    %894 = vmatprep.subr.mxu0 0.0
    %895 = vmatpush1.xpose.msra.mxu0 0.0
    %896 = vmatprep.subr.mxu0 0.0
    %897 = vmatpush1.xpose.msra.mxu0 0.0
    %898 = vmatprep.subr.mxu0 0.0
    %899 = vmatpush1.xpose.msra.mxu0 0.0
    %900 = vmatprep.subr.mxu0 0.0
    %901 = vmatpush1.xpose.msra.mxu0 0.0
    %902 = vmatprep.subr.mxu0 0.0
    %903 = vmatpush1.xpose.msra.mxu0 0.0
    %904 = vmatprep.subr.mxu0 0.0
    %905 = vmatpush1.xpose.msra.mxu0 0.0
    %906 = vmatprep.subr.mxu0 0.0
    %907 = vmatpush1.xpose.msra.mxu0 0.0
    %908 = vmatprep.subr.mxu0 0.0
    %909 = vmatpush1.xpose.msra.mxu0 0.0
    %910 = vmatprep.mubr.f32.mxu0 0.0
    %911 = vmatmul.mubr.f32.gmra.mrb[0].mxu0 %v842
    %v912 = vpop.f32.mrb[0].mxu0
    %v913 = vadd.f32 0.0, %v912
    %v914 = vpop.f32.mrb[0].mxu0
    %915 = vdwg.mxu0
    %v916 = vsel %vm471, %v432, 0
    %v918 = vsel %vm471, %v446, 0
    %920 = vmatprep.subr.mxu0 0.0
    %921 = vmatpush1.xpose.msra.mxu0 %v918
    %922 = vmatprep.subr.mxu0 0.0
    %923 = vmatpush1.xpose.msra.mxu0 0.0
    %924 = vmatprep.subr.mxu0 0.0
    %925 = vmatpush1.xpose.msra.mxu0 0.0
    %926 = vmatprep.subr.mxu0 0.0
    %927 = vmatpush1.xpose.msra.mxu0 0.0
    %928 = vmatprep.subr.mxu0 0.0
    %929 = vmatpush1.xpose.msra.mxu0 0.0
    %930 = vmatprep.subr.mxu0 0.0
    %931 = vmatpush1.xpose.msra.mxu0 0.0
    %932 = vmatprep.subr.mxu0 0.0
    %933 = vmatpush1.xpose.msra.mxu0 0.0
    %934 = vmatprep.subr.mxu0 0.0
    %935 = vmatpush1.xpose.msra.mxu0 0.0
    %936 = vmatprep.subr.mxu0 0.0
    %937 = vmatpush1.xpose.msra.mxu0 0.0
    %938 = vmatprep.subr.mxu0 0.0
    %939 = vmatpush1.xpose.msra.mxu0 0.0
    %940 = vmatprep.subr.mxu0 0.0
    %941 = vmatpush1.xpose.msra.mxu0 0.0
    %942 = vmatprep.subr.mxu0 0.0
    %943 = vmatpush1.xpose.msra.mxu0 0.0
    %944 = vmatprep.subr.mxu0 0.0
    %945 = vmatpush1.xpose.msra.mxu0 0.0
    %946 = vmatprep.subr.mxu0 0.0
    %947 = vmatpush1.xpose.msra.mxu0 0.0
    %948 = vmatprep.subr.mxu0 0.0
    %949 = vmatpush1.xpose.msra.mxu0 0.0
    %950 = vmatprep.subr.mxu0 0.0
    %951 = vmatpush1.xpose.msra.mxu0 0.0
    %952 = vmatprep.subr.mxu0 0.0
    %953 = vmatpush1.xpose.msra.mxu0 0.0
    %954 = vmatprep.subr.mxu0 0.0
    %955 = vmatpush1.xpose.msra.mxu0 0.0
    %956 = vmatprep.subr.mxu0 0.0
    %957 = vmatpush1.xpose.msra.mxu0 0.0
    %958 = vmatprep.subr.mxu0 0.0
    %959 = vmatpush1.xpose.msra.mxu0 0.0
    %960 = vmatprep.subr.mxu0 0.0
    %961 = vmatpush1.xpose.msra.mxu0 0.0
    %962 = vmatprep.subr.mxu0 0.0
    %963 = vmatpush1.xpose.msra.mxu0 0.0
    %964 = vmatprep.subr.mxu0 0.0
    %965 = vmatpush1.xpose.msra.mxu0 0.0
    %966 = vmatprep.subr.mxu0 0.0
    %967 = vmatpush1.xpose.msra.mxu0 0.0
    %968 = vmatprep.subr.mxu0 0.0
    %969 = vmatpush1.xpose.msra.mxu0 0.0
    %970 = vmatprep.subr.mxu0 0.0
    %971 = vmatpush1.xpose.msra.mxu0 0.0
    %972 = vmatprep.subr.mxu0 0.0
    %973 = vmatpush1.xpose.msra.mxu0 0.0
    %974 = vmatprep.subr.mxu0 0.0
    %975 = vmatpush1.xpose.msra.mxu0 0.0
    %976 = vmatprep.subr.mxu0 0.0
    %977 = vmatpush1.xpose.msra.mxu0 0.0
    %978 = vmatprep.subr.mxu0 0.0
    %979 = vmatpush1.xpose.msra.mxu0 0.0
    %980 = vmatprep.subr.mxu0 0.0
    %981 = vmatpush1.xpose.msra.mxu0 0.0
    %982 = vmatprep.subr.mxu0 0.0
    %983 = vmatpush1.xpose.msra.mxu0 0.0
    %984 = vmatprep.mubr.f32.mxu0 0.0
    %985 = vmatmul.mubr.f32.gmra.mrb[0].mxu0 %v916
    %v986 = vpop.f32.mrb[0].mxu0
    %v987 = vadd.f32 0.0, %v986
    %v988 = vpop.f32.mrb[0].mxu0
    %989 = vdwg.mxu0
    %v990 = vsel %vm471, %v436, 0
    %v992 = vsel %vm471, %v450, 0
    %994 = vmatprep.subr.mxu0 0.0
    %995 = vmatpush1.xpose.msra.mxu0 %v992
    %996 = vmatprep.subr.mxu0 0.0
    %997 = vmatpush1.xpose.msra.mxu0 0.0
    %998 = vmatprep.subr.mxu0 0.0
    %999 = vmatpush1.xpose.msra.mxu0 0.0
    %1000 = vmatprep.subr.mxu0 0.0
    %1001 = vmatpush1.xpose.msra.mxu0 0.0
    %1002 = vmatprep.subr.mxu0 0.0
    %1003 = vmatpush1.xpose.msra.mxu0 0.0
    %1004 = vmatprep.subr.mxu0 0.0
    %1005 = vmatpush1.xpose.msra.mxu0 0.0
    %1006 = vmatprep.subr.mxu0 0.0
    %1007 = vmatpush1.xpose.msra.mxu0 0.0
    %1008 = vmatprep.subr.mxu0 0.0
    %1009 = vmatpush1.xpose.msra.mxu0 0.0
    %1010 = vmatprep.subr.mxu0 0.0
    %1011 = vmatpush1.xpose.msra.mxu0 0.0
    %1012 = vmatprep.subr.mxu0 0.0
    %1013 = vmatpush1.xpose.msra.mxu0 0.0
    %1014 = vmatprep.subr.mxu0 0.0
    %1015 = vmatpush1.xpose.msra.mxu0 0.0
    %1016 = vmatprep.subr.mxu0 0.0
    %1017 = vmatpush1.xpose.msra.mxu0 0.0
    %1018 = vmatprep.subr.mxu0 0.0
    %1019 = vmatpush1.xpose.msra.mxu0 0.0
    %1020 = vmatprep.subr.mxu0 0.0
    %1021 = vmatpush1.xpose.msra.mxu0 0.0
    %1022 = vmatprep.subr.mxu0 0.0
    %1023 = vmatpush1.xpose.msra.mxu0 0.0
    %1024 = vmatprep.subr.mxu0 0.0
    %1025 = vmatpush1.xpose.msra.mxu0 0.0
    %1026 = vmatprep.subr.mxu0 0.0
    %1027 = vmatpush1.xpose.msra.mxu0 0.0
    %1028 = vmatprep.subr.mxu0 0.0
    %1029 = vmatpush1.xpose.msra.mxu0 0.0
    %1030 = vmatprep.subr.mxu0 0.0
    %1031 = vmatpush1.xpose.msra.mxu0 0.0
    %1032 = vmatprep.subr.mxu0 0.0
    %1033 = vmatpush1.xpose.msra.mxu0 0.0
    %1034 = vmatprep.subr.mxu0 0.0
    %1035 = vmatpush1.xpose.msra.mxu0 0.0
    %1036 = vmatprep.subr.mxu0 0.0
    %1037 = vmatpush1.xpose.msra.mxu0 0.0
    %1038 = vmatprep.subr.mxu0 0.0
    %1039 = vmatpush1.xpose.msra.mxu0 0.0
    %1040 = vmatprep.subr.mxu0 0.0
    %1041 = vmatpush1.xpose.msra.mxu0 0.0
    %1042 = vmatprep.subr.mxu0 0.0
    %1043 = vmatpush1.xpose.msra.mxu0 0.0
    %1044 = vmatprep.subr.mxu0 0.0
    %1045 = vmatpush1.xpose.msra.mxu0 0.0
    %1046 = vmatprep.subr.mxu0 0.0
    %1047 = vmatpush1.xpose.msra.mxu0 0.0
    %1048 = vmatprep.subr.mxu0 0.0
    %1049 = vmatpush1.xpose.msra.mxu0 0.0
    %1050 = vmatprep.subr.mxu0 0.0
    %1051 = vmatpush1.xpose.msra.mxu0 0.0
    %1052 = vmatprep.subr.mxu0 0.0
    %1053 = vmatpush1.xpose.msra.mxu0 0.0
    %1054 = vmatprep.subr.mxu0 0.0
    %1055 = vmatpush1.xpose.msra.mxu0 0.0
    %1056 = vmatprep.subr.mxu0 0.0
    %1057 = vmatpush1.xpose.msra.mxu0 0.0
    %1058 = vmatprep.mubr.f32.mxu0 0.0
    %1059 = vmatmul.mubr.f32.gmra.mrb[0].mxu0 %v990
    %v1060 = vpop.f32.mrb[0].mxu0
    %v1061 = vadd.f32 0.0, %v1060
    %v1062 = vpop.f32.mrb[0].mxu0
    %1063 = vdwg.mxu0
    %v1064 = vmul.f32 %v543, 0.35355338
    %v1065 = vmul.f32 %v617, 0.35355338
    %v1066 = vmul.f32 %v691, 0.35355338
    %v1067 = vmul.f32 %v765, 0.35355338
    %v1068 = vmul.f32 %v839, 0.35355338
    %v1069 = vmul.f32 %v913, 0.35355338
    %v1070 = vmul.f32 %v987, 0.35355338
    %v1071 = vmul.f32 %v1061, 0.35355338
    %v1072 = vld [vmem:[#allocation8] sm:$0xff]
    %v1073 = vld [vmem:[#allocation8 + $0x8] sm:$0xff]
    %v1074 = vmul.f32 %v1072, -1e+09
    %v1075 = vmul.f32 %v1073, -1e+09
    %v1076 = vadd.f32 %v1064, %v1074
    %v1077 = vadd.f32 %v1065, %v1074
    %v1078 = vadd.f32 %v1066, %v1074
    %v1079 = vadd.f32 %v1067, %v1074
    %v1080 = vadd.f32 %v1068, %v1075
    %v1081 = vadd.f32 %v1069, %v1075
    %v1082 = vadd.f32 %v1070, %v1075
    %v1083 = vadd.f32 %v1071, %v1075
    %v1084 = vsel %vm471, %v1076, -inf
    %1085 = vmax.xlane.f32.xlu0 %v1084
    %v1086 = vpop.xlane.xlu0 %1085
    %v1087 = vsel %vm471, %v1077, -inf
    %1088 = vmax.xlane.f32.xlu0 %v1087
    %v1089 = vpop.xlane.xlu0 %1088
    %v1090 = vsel %vm471, %v1078, -inf
    %1091 = vmax.xlane.f32.xlu0 %v1090
    %v1092 = vpop.xlane.xlu0 %1091
    %v1093 = vsel %vm471, %v1079, -inf
    %1094 = vmax.xlane.f32.xlu0 %v1093
    %v1095 = vpop.xlane.xlu0 %1094
    %v1096 = vsel %vm471, %v1080, -inf
    %1097 = vmax.xlane.f32.xlu0 %v1096
    %v1098 = vpop.xlane.xlu0 %1097
    %v1099 = vsel %vm471, %v1081, -inf
    %1100 = vmax.xlane.f32.xlu0 %v1099
    %v1101 = vpop.xlane.xlu0 %1100
    %v1102 = vsel %vm471, %v1082, -inf
    %1103 = vmax.xlane.f32.xlu0 %v1102
    %v1104 = vpop.xlane.xlu0 %1103
    %v1105 = vsel %vm471, %v1083, -inf
    %1106 = vmax.xlane.f32.xlu0 %v1105
    %v1107 = vpop.xlane.xlu0 %1106
    %v1108 = vsub.f32 %v1076, %v1086
    %v1109 = vsub.f32 %v1077, %v1089
    %v1110 = vsub.f32 %v1078, %v1092
    %v1111 = vsub.f32 %v1079, %v1095
    %v1112 = vsub.f32 %v1080, %v1098
    %v1113 = vsub.f32 %v1081, %v1101
    %v1114 = vsub.f32 %v1082, %v1104
    %v1115 = vsub.f32 %v1083, %v1107
    %v1116 = vmul.f32 %v1108, 1.442695
    %v1117 = vpow.pop %v1116
    %v1118 = vmul.f32 %v1109, 1.442695
    %v1119 = vpow.pop %v1118
    %v1120 = vmul.f32 %v1110, 1.442695
    %v1121 = vpow.pop %v1120
    %v1122 = vmul.f32 %v1111, 1.442695
    %v1123 = vpow.pop %v1122
    %v1124 = vmul.f32 %v1112, 1.442695
    %v1125 = vpow.pop %v1124
    %v1126 = vmul.f32 %v1113, 1.442695
    %v1127 = vpow.pop %v1126
    %v1128 = vmul.f32 %v1114, 1.442695
    %v1129 = vpow.pop %v1128
    %v1130 = vmul.f32 %v1115, 1.442695
    %v1131 = vpow.pop %v1130
    %v1132 = vsel %vm471, %v1117, 0.0
    %1133 = vadd.xlane.f32.xlu0 %v1132
    %v1134 = vpop.xlane.xlu0 %1133
    %v1135 = vsel %vm471, %v1119, 0.0
    %1136 = vadd.xlane.f32.xlu0 %v1135
    %v1137 = vpop.xlane.xlu0 %1136
    %v1138 = vsel %vm471, %v1121, 0.0
    %1139 = vadd.xlane.f32.xlu0 %v1138
    %v1140 = vpop.xlane.xlu0 %1139
    %v1141 = vsel %vm471, %v1123, 0.0
    %1142 = vadd.xlane.f32.xlu0 %v1141
    %v1143 = vpop.xlane.xlu0 %1142
    %v1144 = vsel %vm471, %v1125, 0.0
    %1145 = vadd.xlane.f32.xlu0 %v1144
    %v1146 = vpop.xlane.xlu0 %1145
    %v1147 = vsel %vm471, %v1127, 0.0
    %1148 = vadd.xlane.f32.xlu0 %v1147
    %v1149 = vpop.xlane.xlu0 %1148
    %v1150 = vsel %vm471, %v1129, 0.0
    %1151 = vadd.xlane.f32.xlu0 %v1150
    %v1152 = vpop.xlane.xlu0 %1151
    %v1153 = vsel %vm471, %v1131, 0.0
    %1154 = vadd.xlane.f32.xlu0 %v1153
    %v1155 = vpop.xlane.xlu0 %1154
    %v1156 = vrcp.pop %v1134
    %v1157 = vmul.f32 %v1117, %v1156
    %v1158 = vrcp.pop %v1137
    %v1159 = vmul.f32 %v1119, %v1158
    %v1160 = vrcp.pop %v1140
    %v1161 = vmul.f32 %v1121, %v1160
    %v1162 = vrcp.pop %v1143
    %v1163 = vmul.f32 %v1123, %v1162
    %v1164 = vrcp.pop %v1146
    %v1165 = vmul.f32 %v1125, %v1164
    %v1166 = vrcp.pop %v1149
    %v1167 = vmul.f32 %v1127, %v1166
    %v1168 = vrcp.pop %v1152
    %v1169 = vmul.f32 %v1129, %v1168
    %v1170 = vrcp.pop %v1155
    %v1171 = vmul.f32 %v1131, %v1170
    %v1173 = vsel %vm471, %v1157, 0
    %1175 = vmatprep.subr.mxu0 0.0
    %1176 = vmatpush1.msra.mxu0 %v415
    %1177 = vmatprep.subr.mxu0 0.0
    %1178 = vmatpush1.msra.mxu0 0.0
    %1179 = vmatprep.subr.mxu0 0.0
    %1180 = vmatpush1.msra.mxu0 0.0
    %1181 = vmatprep.subr.mxu0 0.0
    %1182 = vmatpush1.msra.mxu0 0.0
    %1183 = vmatprep.subr.mxu0 0.0
    %1184 = vmatpush1.msra.mxu0 0.0
    %1185 = vmatprep.subr.mxu0 0.0
    %1186 = vmatpush1.msra.mxu0 0.0
    %1187 = vmatprep.subr.mxu0 0.0
    %1188 = vmatpush1.msra.mxu0 0.0
    %1189 = vmatprep.subr.mxu0 0.0
    %1190 = vmatpush1.msra.mxu0 0.0
    %1191 = vmatprep.subr.mxu0 0.0
    %1192 = vmatpush1.msra.mxu0 0.0
    %1193 = vmatprep.subr.mxu0 0.0
    %1194 = vmatpush1.msra.mxu0 0.0
    %1195 = vmatprep.subr.mxu0 0.0
    %1196 = vmatpush1.msra.mxu0 0.0
    %1197 = vmatprep.subr.mxu0 0.0
    %1198 = vmatpush1.msra.mxu0 0.0
    %1199 = vmatprep.subr.mxu0 0.0
    %1200 = vmatpush1.msra.mxu0 0.0
    %1201 = vmatprep.subr.mxu0 0.0
    %1202 = vmatpush1.msra.mxu0 0.0
    %1203 = vmatprep.subr.mxu0 0.0
    %1204 = vmatpush1.msra.mxu0 0.0
    %1205 = vmatprep.subr.mxu0 0.0
    %1206 = vmatpush1.msra.mxu0 0.0
    %1207 = vmatprep.subr.mxu0 0.0
    %1208 = vmatpush1.msra.mxu0 0.0
    %1209 = vmatprep.subr.mxu0 0.0
    %1210 = vmatpush1.msra.mxu0 0.0
    %1211 = vmatprep.subr.mxu0 0.0
    %1212 = vmatpush1.msra.mxu0 0.0
    %1213 = vmatprep.subr.mxu0 0.0
    %1214 = vmatpush1.msra.mxu0 0.0
    %1215 = vmatprep.subr.mxu0 0.0
    %1216 = vmatpush1.msra.mxu0 0.0
    %1217 = vmatprep.subr.mxu0 0.0
    %1218 = vmatpush1.msra.mxu0 0.0
    %1219 = vmatprep.subr.mxu0 0.0
    %1220 = vmatpush1.msra.mxu0 0.0
    %1221 = vmatprep.subr.mxu0 0.0
    %1222 = vmatpush1.msra.mxu0 0.0
    %1223 = vmatprep.subr.mxu0 0.0
    %1224 = vmatpush1.msra.mxu0 0.0
    %1225 = vmatprep.subr.mxu0 0.0
    %1226 = vmatpush1.msra.mxu0 0.0
    %1227 = vmatprep.subr.mxu0 0.0
    %1228 = vmatpush1.msra.mxu0 0.0
    %1229 = vmatprep.subr.mxu0 0.0
    %1230 = vmatpush1.msra.mxu0 0.0
    %1231 = vmatprep.subr.mxu0 0.0
    %1232 = vmatpush1.msra.mxu0 0.0
    %1233 = vmatprep.subr.mxu0 0.0
    %1234 = vmatpush1.msra.mxu0 0.0
    %1235 = vmatprep.subr.mxu0 0.0
    %1236 = vmatpush1.msra.mxu0 0.0
    %1237 = vmatprep.subr.mxu0 0.0
    %1238 = vmatpush1.msra.mxu0 0.0
    %1239 = vmatprep.mubr.f32.mxu0 0.0
    %1240 = vmatmul.mubr.f32.gmra.mrb[0].mxu0 %v1173
    %v1241 = vpop.f32.mrb[0].mxu0
    %v1242 = vadd.f32 0.0, %v1241
    %v1243 = vpop.f32.mrb[0].mxu0
    %1244 = vdwg.mxu0
    %v1246 = vsel %vm471, %v1159, 0
    %1248 = vmatprep.subr.mxu0 0.0
    %1249 = vmatpush1.msra.mxu0 %v454
    %1250 = vmatprep.subr.mxu0 0.0
    %1251 = vmatpush1.msra.mxu0 0.0
    %1252 = vmatprep.subr.mxu0 0.0
    %1253 = vmatpush1.msra.mxu0 0.0
    %1254 = vmatprep.subr.mxu0 0.0
    %1255 = vmatpush1.msra.mxu0 0.0
    %1256 = vmatprep.subr.mxu0 0.0
    %1257 = vmatpush1.msra.mxu0 0.0
    %1258 = vmatprep.subr.mxu0 0.0
    %1259 = vmatpush1.msra.mxu0 0.0
    %1260 = vmatprep.subr.mxu0 0.0
    %1261 = vmatpush1.msra.mxu0 0.0
    %1262 = vmatprep.subr.mxu0 0.0
    %1263 = vmatpush1.msra.mxu0 0.0
    %1264 = vmatprep.subr.mxu0 0.0
    %1265 = vmatpush1.msra.mxu0 0.0
    %1266 = vmatprep.subr.mxu0 0.0
    %1267 = vmatpush1.msra.mxu0 0.0
    %1268 = vmatprep.subr.mxu0 0.0
    %1269 = vmatpush1.msra.mxu0 0.0
    %1270 = vmatprep.subr.mxu0 0.0
    %1271 = vmatpush1.msra.mxu0 0.0
    %1272 = vmatprep.subr.mxu0 0.0
    %1273 = vmatpush1.msra.mxu0 0.0
    %1274 = vmatprep.subr.mxu0 0.0
    %1275 = vmatpush1.msra.mxu0 0.0
    %1276 = vmatprep.subr.mxu0 0.0
    %1277 = vmatpush1.msra.mxu0 0.0
    %1278 = vmatprep.subr.mxu0 0.0
    %1279 = vmatpush1.msra.mxu0 0.0
    %1280 = vmatprep.subr.mxu0 0.0
    %1281 = vmatpush1.msra.mxu0 0.0
    %1282 = vmatprep.subr.mxu0 0.0
    %1283 = vmatpush1.msra.mxu0 0.0
    %1284 = vmatprep.subr.mxu0 0.0
    %1285 = vmatpush1.msra.mxu0 0.0
    %1286 = vmatprep.subr.mxu0 0.0
    %1287 = vmatpush1.msra.mxu0 0.0
    %1288 = vmatprep.subr.mxu0 0.0
    %1289 = vmatpush1.msra.mxu0 0.0
    %1290 = vmatprep.subr.mxu0 0.0
    %1291 = vmatpush1.msra.mxu0 0.0
    %1292 = vmatprep.subr.mxu0 0.0
    %1293 = vmatpush1.msra.mxu0 0.0
    %1294 = vmatprep.subr.mxu0 0.0
    %1295 = vmatpush1.msra.mxu0 0.0
    %1296 = vmatprep.subr.mxu0 0.0
    %1297 = vmatpush1.msra.mxu0 0.0
    %1298 = vmatprep.subr.mxu0 0.0
    %1299 = vmatpush1.msra.mxu0 0.0
    %1300 = vmatprep.subr.mxu0 0.0
    %1301 = vmatpush1.msra.mxu0 0.0
    %1302 = vmatprep.subr.mxu0 0.0
    %1303 = vmatpush1.msra.mxu0 0.0
    %1304 = vmatprep.subr.mxu0 0.0
    %1305 = vmatpush1.msra.mxu0 0.0
    %1306 = vmatprep.subr.mxu0 0.0
    %1307 = vmatpush1.msra.mxu0 0.0
    %1308 = vmatprep.subr.mxu0 0.0
    %1309 = vmatpush1.msra.mxu0 0.0
    %1310 = vmatprep.subr.mxu0 0.0
    %1311 = vmatpush1.msra.mxu0 0.0
    %1312 = vmatprep.mubr.f32.mxu0 0.0
    %1313 = vmatmul.mubr.f32.gmra.mrb[0].mxu0 %v1246
    %v1314 = vpop.f32.mrb[0].mxu0
    %v1315 = vadd.f32 0.0, %v1314
    %v1316 = vpop.f32.mrb[0].mxu0
    %1317 = vdwg.mxu0
    %v1319 = vsel %vm471, %v1161, 0
    %1321 = vmatprep.subr.mxu0 0.0
    %1322 = vmatpush1.msra.mxu0 %v460
    %1323 = vmatprep.subr.mxu0 0.0
    %1324 = vmatpush1.msra.mxu0 0.0
    %1325 = vmatprep.subr.mxu0 0.0
    %1326 = vmatpush1.msra.mxu0 0.0
    %1327 = vmatprep.subr.mxu0 0.0
    %1328 = vmatpush1.msra.mxu0 0.0
    %1329 = vmatprep.subr.mxu0 0.0
    %1330 = vmatpush1.msra.mxu0 0.0
    %1331 = vmatprep.subr.mxu0 0.0
    %1332 = vmatpush1.msra.mxu0 0.0
    %1333 = vmatprep.subr.mxu0 0.0
    %1334 = vmatpush1.msra.mxu0 0.0
    %1335 = vmatprep.subr.mxu0 0.0
    %1336 = vmatpush1.msra.mxu0 0.0
    %1337 = vmatprep.subr.mxu0 0.0
    %1338 = vmatpush1.msra.mxu0 0.0
    %1339 = vmatprep.subr.mxu0 0.0
    %1340 = vmatpush1.msra.mxu0 0.0
    %1341 = vmatprep.subr.mxu0 0.0
    %1342 = vmatpush1.msra.mxu0 0.0
    %1343 = vmatprep.subr.mxu0 0.0
    %1344 = vmatpush1.msra.mxu0 0.0
    %1345 = vmatprep.subr.mxu0 0.0
    %1346 = vmatpush1.msra.mxu0 0.0
    %1347 = vmatprep.subr.mxu0 0.0
    %1348 = vmatpush1.msra.mxu0 0.0
    %1349 = vmatprep.subr.mxu0 0.0
    %1350 = vmatpush1.msra.mxu0 0.0
    %1351 = vmatprep.subr.mxu0 0.0
    %1352 = vmatpush1.msra.mxu0 0.0
    %1353 = vmatprep.subr.mxu0 0.0
    %1354 = vmatpush1.msra.mxu0 0.0
    %1355 = vmatprep.subr.mxu0 0.0
    %1356 = vmatpush1.msra.mxu0 0.0
    %1357 = vmatprep.subr.mxu0 0.0
    %1358 = vmatpush1.msra.mxu0 0.0
    %1359 = vmatprep.subr.mxu0 0.0
    %1360 = vmatpush1.msra.mxu0 0.0
    %1361 = vmatprep.subr.mxu0 0.0
    %1362 = vmatpush1.msra.mxu0 0.0
    %1363 = vmatprep.subr.mxu0 0.0
    %1364 = vmatpush1.msra.mxu0 0.0
    %1365 = vmatprep.subr.mxu0 0.0
    %1366 = vmatpush1.msra.mxu0 0.0
    %1367 = vmatprep.subr.mxu0 0.0
    %1368 = vmatpush1.msra.mxu0 0.0
    %1369 = vmatprep.subr.mxu0 0.0
    %1370 = vmatpush1.msra.mxu0 0.0
    %1371 = vmatprep.subr.mxu0 0.0
    %1372 = vmatpush1.msra.mxu0 0.0
    %1373 = vmatprep.subr.mxu0 0.0
    %1374 = vmatpush1.msra.mxu0 0.0
    %1375 = vmatprep.subr.mxu0 0.0
    %1376 = vmatpush1.msra.mxu0 0.0
    %1377 = vmatprep.subr.mxu0 0.0
    %1378 = vmatpush1.msra.mxu0 0.0
    %1379 = vmatprep.subr.mxu0 0.0
    %1380 = vmatpush1.msra.mxu0 0.0
    %1381 = vmatprep.subr.mxu0 0.0
    %1382 = vmatpush1.msra.mxu0 0.0
    %1383 = vmatprep.subr.mxu0 0.0
    %1384 = vmatpush1.msra.mxu0 0.0
    %1385 = vmatprep.mubr.f32.mxu0 0.0
    %1386 = vmatmul.mubr.f32.gmra.mrb[0].mxu0 %v1319
    %v1387 = vpop.f32.mrb[0].mxu0
    %v1388 = vadd.f32 0.0, %v1387
    %v1389 = vpop.f32.mrb[0].mxu0
    %1390 = vdwg.mxu0
    %v1392 = vsel %vm471, %v1163, 0
    %1394 = vmatprep.subr.mxu0 0.0
    %1395 = vmatpush1.msra.mxu0 %v466
    %1396 = vmatprep.subr.mxu0 0.0
    %1397 = vmatpush1.msra.mxu0 0.0
    %1398 = vmatprep.subr.mxu0 0.0
    %1399 = vmatpush1.msra.mxu0 0.0
    %1400 = vmatprep.subr.mxu0 0.0
    %1401 = vmatpush1.msra.mxu0 0.0
    %1402 = vmatprep.subr.mxu0 0.0
    %1403 = vmatpush1.msra.mxu0 0.0
    %1404 = vmatprep.subr.mxu0 0.0
    %1405 = vmatpush1.msra.mxu0 0.0
    %1406 = vmatprep.subr.mxu0 0.0
    %1407 = vmatpush1.msra.mxu0 0.0
    %1408 = vmatprep.subr.mxu0 0.0
    %1409 = vmatpush1.msra.mxu0 0.0
    %1410 = vmatprep.subr.mxu0 0.0
    %1411 = vmatpush1.msra.mxu0 0.0
    %1412 = vmatprep.subr.mxu0 0.0
    %1413 = vmatpush1.msra.mxu0 0.0
    %1414 = vmatprep.subr.mxu0 0.0
    %1415 = vmatpush1.msra.mxu0 0.0
    %1416 = vmatprep.subr.mxu0 0.0
    %1417 = vmatpush1.msra.mxu0 0.0
    %1418 = vmatprep.subr.mxu0 0.0
    %1419 = vmatpush1.msra.mxu0 0.0
    %1420 = vmatprep.subr.mxu0 0.0
    %1421 = vmatpush1.msra.mxu0 0.0
    %1422 = vmatprep.subr.mxu0 0.0
    %1423 = vmatpush1.msra.mxu0 0.0
    %1424 = vmatprep.subr.mxu0 0.0
    %1425 = vmatpush1.msra.mxu0 0.0
    %1426 = vmatprep.subr.mxu0 0.0
    %1427 = vmatpush1.msra.mxu0 0.0
    %1428 = vmatprep.subr.mxu0 0.0
    %1429 = vmatpush1.msra.mxu0 0.0
    %1430 = vmatprep.subr.mxu0 0.0
    %1431 = vmatpush1.msra.mxu0 0.0
    %1432 = vmatprep.subr.mxu0 0.0
    %1433 = vmatpush1.msra.mxu0 0.0
    %1434 = vmatprep.subr.mxu0 0.0
    %1435 = vmatpush1.msra.mxu0 0.0
    %1436 = vmatprep.subr.mxu0 0.0
    %1437 = vmatpush1.msra.mxu0 0.0
    %1438 = vmatprep.subr.mxu0 0.0
    %1439 = vmatpush1.msra.mxu0 0.0
    %1440 = vmatprep.subr.mxu0 0.0
    %1441 = vmatpush1.msra.mxu0 0.0
    %1442 = vmatprep.subr.mxu0 0.0
    %1443 = vmatpush1.msra.mxu0 0.0
    %1444 = vmatprep.subr.mxu0 0.0
    %1445 = vmatpush1.msra.mxu0 0.0
    %1446 = vmatprep.subr.mxu0 0.0
    %1447 = vmatpush1.msra.mxu0 0.0
    %1448 = vmatprep.subr.mxu0 0.0
    %1449 = vmatpush1.msra.mxu0 0.0
    %1450 = vmatprep.subr.mxu0 0.0
    %1451 = vmatpush1.msra.mxu0 0.0
    %1452 = vmatprep.subr.mxu0 0.0
    %1453 = vmatpush1.msra.mxu0 0.0
    %1454 = vmatprep.subr.mxu0 0.0
    %1455 = vmatpush1.msra.mxu0 0.0
    %1456 = vmatprep.subr.mxu0 0.0
    %1457 = vmatpush1.msra.mxu0 0.0
    %1458 = vmatprep.mubr.f32.mxu0 0.0
    %1459 = vmatmul.mubr.f32.gmra.mrb[0].mxu0 %v1392
    %v1460 = vpop.f32.mrb[0].mxu0
    %v1461 = vadd.f32 0.0, %v1460
    %v1462 = vpop.f32.mrb[0].mxu0
    %1463 = vdwg.mxu0
    %v1465 = vsel %vm471, %v1165, 0
    %1467 = vmatprep.subr.mxu0 0.0
    %1468 = vmatpush1.msra.mxu0 %v420
    %1469 = vmatprep.subr.mxu0 0.0
    %1470 = vmatpush1.msra.mxu0 0.0
    %1471 = vmatprep.subr.mxu0 0.0
    %1472 = vmatpush1.msra.mxu0 0.0
    %1473 = vmatprep.subr.mxu0 0.0
    %1474 = vmatpush1.msra.mxu0 0.0
    %1475 = vmatprep.subr.mxu0 0.0
    %1476 = vmatpush1.msra.mxu0 0.0
    %1477 = vmatprep.subr.mxu0 0.0
    %1478 = vmatpush1.msra.mxu0 0.0
    %1479 = vmatprep.subr.mxu0 0.0
    %1480 = vmatpush1.msra.mxu0 0.0
    %1481 = vmatprep.subr.mxu0 0.0
    %1482 = vmatpush1.msra.mxu0 0.0
    %1483 = vmatprep.subr.mxu0 0.0
    %1484 = vmatpush1.msra.mxu0 0.0
    %1485 = vmatprep.subr.mxu0 0.0
    %1486 = vmatpush1.msra.mxu0 0.0
    %1487 = vmatprep.subr.mxu0 0.0
    %1488 = vmatpush1.msra.mxu0 0.0
    %1489 = vmatprep.subr.mxu0 0.0
    %1490 = vmatpush1.msra.mxu0 0.0
    %1491 = vmatprep.subr.mxu0 0.0
    %1492 = vmatpush1.msra.mxu0 0.0
    %1493 = vmatprep.subr.mxu0 0.0
    %1494 = vmatpush1.msra.mxu0 0.0
    %1495 = vmatprep.subr.mxu0 0.0
    %1496 = vmatpush1.msra.mxu0 0.0
    %1497 = vmatprep.subr.mxu0 0.0
    %1498 = vmatpush1.msra.mxu0 0.0
    %1499 = vmatprep.subr.mxu0 0.0
    %1500 = vmatpush1.msra.mxu0 0.0
    %1501 = vmatprep.subr.mxu0 0.0
    %1502 = vmatpush1.msra.mxu0 0.0
    %1503 = vmatprep.subr.mxu0 0.0
    %1504 = vmatpush1.msra.mxu0 0.0
    %1505 = vmatprep.subr.mxu0 0.0
    %1506 = vmatpush1.msra.mxu0 0.0
    %1507 = vmatprep.subr.mxu0 0.0
    %1508 = vmatpush1.msra.mxu0 0.0
    %1509 = vmatprep.subr.mxu0 0.0
    %1510 = vmatpush1.msra.mxu0 0.0
    %1511 = vmatprep.subr.mxu0 0.0
    %1512 = vmatpush1.msra.mxu0 0.0
    %1513 = vmatprep.subr.mxu0 0.0
    %1514 = vmatpush1.msra.mxu0 0.0
    %1515 = vmatprep.subr.mxu0 0.0
    %1516 = vmatpush1.msra.mxu0 0.0
    %1517 = vmatprep.subr.mxu0 0.0
    %1518 = vmatpush1.msra.mxu0 0.0
    %1519 = vmatprep.subr.mxu0 0.0
    %1520 = vmatpush1.msra.mxu0 0.0
    %1521 = vmatprep.subr.mxu0 0.0
    %1522 = vmatpush1.msra.mxu0 0.0
    %1523 = vmatprep.subr.mxu0 0.0
    %1524 = vmatpush1.msra.mxu0 0.0
    %1525 = vmatprep.subr.mxu0 0.0
    %1526 = vmatpush1.msra.mxu0 0.0
    %1527 = vmatprep.subr.mxu0 0.0
    %1528 = vmatpush1.msra.mxu0 0.0
    %1529 = vmatprep.subr.mxu0 0.0
    %1530 = vmatpush1.msra.mxu0 0.0
    %1531 = vmatprep.mubr.f32.mxu0 0.0
    %1532 = vmatmul.mubr.f32.gmra.mrb[0].mxu0 %v1465
    %v1533 = vpop.f32.mrb[0].mxu0
    %v1534 = vadd.f32 0.0, %v1533
    %v1535 = vpop.f32.mrb[0].mxu0
    %1536 = vdwg.mxu0
    %v1538 = vsel %vm471, %v1167, 0
    %1540 = vmatprep.subr.mxu0 0.0
    %1541 = vmatpush1.msra.mxu0 %v456
    %1542 = vmatprep.subr.mxu0 0.0
    %1543 = vmatpush1.msra.mxu0 0.0
    %1544 = vmatprep.subr.mxu0 0.0
    %1545 = vmatpush1.msra.mxu0 0.0
    %1546 = vmatprep.subr.mxu0 0.0
    %1547 = vmatpush1.msra.mxu0 0.0
    %1548 = vmatprep.subr.mxu0 0.0
    %1549 = vmatpush1.msra.mxu0 0.0
    %1550 = vmatprep.subr.mxu0 0.0
    %1551 = vmatpush1.msra.mxu0 0.0
    %1552 = vmatprep.subr.mxu0 0.0
    %1553 = vmatpush1.msra.mxu0 0.0
    %1554 = vmatprep.subr.mxu0 0.0
    %1555 = vmatpush1.msra.mxu0 0.0
    %1556 = vmatprep.subr.mxu0 0.0
    %1557 = vmatpush1.msra.mxu0 0.0
    %1558 = vmatprep.subr.mxu0 0.0
    %1559 = vmatpush1.msra.mxu0 0.0
    %1560 = vmatprep.subr.mxu0 0.0
    %1561 = vmatpush1.msra.mxu0 0.0
    %1562 = vmatprep.subr.mxu0 0.0
    %1563 = vmatpush1.msra.mxu0 0.0
    %1564 = vmatprep.subr.mxu0 0.0
    %1565 = vmatpush1.msra.mxu0 0.0
    %1566 = vmatprep.subr.mxu0 0.0
    %1567 = vmatpush1.msra.mxu0 0.0
    %1568 = vmatprep.subr.mxu0 0.0
    %1569 = vmatpush1.msra.mxu0 0.0
    %1570 = vmatprep.subr.mxu0 0.0
    %1571 = vmatpush1.msra.mxu0 0.0
    %1572 = vmatprep.subr.mxu0 0.0
    %1573 = vmatpush1.msra.mxu0 0.0
    %1574 = vmatprep.subr.mxu0 0.0
    %1575 = vmatpush1.msra.mxu0 0.0
    %1576 = vmatprep.subr.mxu0 0.0
    %1577 = vmatpush1.msra.mxu0 0.0
    %1578 = vmatprep.subr.mxu0 0.0
    %1579 = vmatpush1.msra.mxu0 0.0
    %1580 = vmatprep.subr.mxu0 0.0
    %1581 = vmatpush1.msra.mxu0 0.0
    %1582 = vmatprep.subr.mxu0 0.0
    %1583 = vmatpush1.msra.mxu0 0.0
    %1584 = vmatprep.subr.mxu0 0.0
    %1585 = vmatpush1.msra.mxu0 0.0
    %1586 = vmatprep.subr.mxu0 0.0
    %1587 = vmatpush1.msra.mxu0 0.0
    %1588 = vmatprep.subr.mxu0 0.0
    %1589 = vmatpush1.msra.mxu0 0.0
    %1590 = vmatprep.subr.mxu0 0.0
    %1591 = vmatpush1.msra.mxu0 0.0
    %1592 = vmatprep.subr.mxu0 0.0
    %1593 = vmatpush1.msra.mxu0 0.0
    %1594 = vmatprep.subr.mxu0 0.0
    %1595 = vmatpush1.msra.mxu0 0.0
    %1596 = vmatprep.subr.mxu0 0.0
    %1597 = vmatpush1.msra.mxu0 0.0
    %1598 = vmatprep.subr.mxu0 0.0
    %1599 = vmatpush1.msra.mxu0 0.0
    %1600 = vmatprep.subr.mxu0 0.0
    %1601 = vmatpush1.msra.mxu0 0.0
    %1602 = vmatprep.subr.mxu0 0.0
    %1603 = vmatpush1.msra.mxu0 0.0
    %1604 = vmatprep.mubr.f32.mxu0 0.0
    %1605 = vmatmul.mubr.f32.gmra.mrb[0].mxu0 %v1538
    %v1606 = vpop.f32.mrb[0].mxu0
    %v1607 = vadd.f32 0.0, %v1606
    %v1608 = vpop.f32.mrb[0].mxu0
    %1609 = vdwg.mxu0
    %v1611 = vsel %vm471, %v1169, 0
    %1613 = vmatprep.subr.mxu0 0.0
    %1614 = vmatpush1.msra.mxu0 %v462
    %1615 = vmatprep.subr.mxu0 0.0
    %1616 = vmatpush1.msra.mxu0 0.0
    %1617 = vmatprep.subr.mxu0 0.0
    %1618 = vmatpush1.msra.mxu0 0.0
    %1619 = vmatprep.subr.mxu0 0.0
    %1620 = vmatpush1.msra.mxu0 0.0
    %1621 = vmatprep.subr.mxu0 0.0
    %1622 = vmatpush1.msra.mxu0 0.0
    %1623 = vmatprep.subr.mxu0 0.0
    %1624 = vmatpush1.msra.mxu0 0.0
    %1625 = vmatprep.subr.mxu0 0.0
    %1626 = vmatpush1.msra.mxu0 0.0
    %1627 = vmatprep.subr.mxu0 0.0
    %1628 = vmatpush1.msra.mxu0 0.0
    %1629 = vmatprep.subr.mxu0 0.0
    %1630 = vmatpush1.msra.mxu0 0.0
    %1631 = vmatprep.subr.mxu0 0.0
    %1632 = vmatpush1.msra.mxu0 0.0
    %1633 = vmatprep.subr.mxu0 0.0
    %1634 = vmatpush1.msra.mxu0 0.0
    %1635 = vmatprep.subr.mxu0 0.0
    %1636 = vmatpush1.msra.mxu0 0.0
    %1637 = vmatprep.subr.mxu0 0.0
    %1638 = vmatpush1.msra.mxu0 0.0
    %1639 = vmatprep.subr.mxu0 0.0
    %1640 = vmatpush1.msra.mxu0 0.0
    %1641 = vmatprep.subr.mxu0 0.0
    %1642 = vmatpush1.msra.mxu0 0.0
    %1643 = vmatprep.subr.mxu0 0.0
    %1644 = vmatpush1.msra.mxu0 0.0
    %1645 = vmatprep.subr.mxu0 0.0
    %1646 = vmatpush1.msra.mxu0 0.0
    %1647 = vmatprep.subr.mxu0 0.0
    %1648 = vmatpush1.msra.mxu0 0.0
    %1649 = vmatprep.subr.mxu0 0.0
    %1650 = vmatpush1.msra.mxu0 0.0
    %1651 = vmatprep.subr.mxu0 0.0
    %1652 = vmatpush1.msra.mxu0 0.0
    %1653 = vmatprep.subr.mxu0 0.0
    %1654 = vmatpush1.msra.mxu0 0.0
    %1655 = vmatprep.subr.mxu0 0.0
    %1656 = vmatpush1.msra.mxu0 0.0
    %1657 = vmatprep.subr.mxu0 0.0
    %1658 = vmatpush1.msra.mxu0 0.0
    %1659 = vmatprep.subr.mxu0 0.0
    %1660 = vmatpush1.msra.mxu0 0.0
    %1661 = vmatprep.subr.mxu0 0.0
    %1662 = vmatpush1.msra.mxu0 0.0
    %1663 = vmatprep.subr.mxu0 0.0
    %1664 = vmatpush1.msra.mxu0 0.0
    %1665 = vmatprep.subr.mxu0 0.0
    %1666 = vmatpush1.msra.mxu0 0.0
    %1667 = vmatprep.subr.mxu0 0.0
    %1668 = vmatpush1.msra.mxu0 0.0
    %1669 = vmatprep.subr.mxu0 0.0
    %1670 = vmatpush1.msra.mxu0 0.0
    %1671 = vmatprep.subr.mxu0 0.0
    %1672 = vmatpush1.msra.mxu0 0.0
    %1673 = vmatprep.subr.mxu0 0.0
    %1674 = vmatpush1.msra.mxu0 0.0
    %1675 = vmatprep.subr.mxu0 0.0
    %1676 = vmatpush1.msra.mxu0 0.0
    %1677 = vmatprep.mubr.f32.mxu0 0.0
    %1678 = vmatmul.mubr.f32.gmra.mrb[0].mxu0 %v1611
    %v1679 = vpop.f32.mrb[0].mxu0
    %v1680 = vadd.f32 0.0, %v1679
    %v1681 = vpop.f32.mrb[0].mxu0
    %1682 = vdwg.mxu0
    %v1684 = vsel %vm471, %v1171, 0
    %1686 = vmatprep.subr.mxu0 0.0
    %1687 = vmatpush1.msra.mxu0 %v468
    %1688 = vmatprep.subr.mxu0 0.0
    %1689 = vmatpush1.msra.mxu0 0.0
    %1690 = vmatprep.subr.mxu0 0.0
    %1691 = vmatpush1.msra.mxu0 0.0
    %1692 = vmatprep.subr.mxu0 0.0
    %1693 = vmatpush1.msra.mxu0 0.0
    %1694 = vmatprep.subr.mxu0 0.0
    %1695 = vmatpush1.msra.mxu0 0.0
    %1696 = vmatprep.subr.mxu0 0.0
    %1697 = vmatpush1.msra.mxu0 0.0
    %1698 = vmatprep.subr.mxu0 0.0
    %1699 = vmatpush1.msra.mxu0 0.0
    %1700 = vmatprep.subr.mxu0 0.0
    %1701 = vmatpush1.msra.mxu0 0.0
    %1702 = vmatprep.subr.mxu0 0.0
    %1703 = vmatpush1.msra.mxu0 0.0
    %1704 = vmatprep.subr.mxu0 0.0
    %1705 = vmatpush1.msra.mxu0 0.0
    %1706 = vmatprep.subr.mxu0 0.0
    %1707 = vmatpush1.msra.mxu0 0.0
    %1708 = vmatprep.subr.mxu0 0.0
    %1709 = vmatpush1.msra.mxu0 0.0
    %1710 = vmatprep.subr.mxu0 0.0
    %1711 = vmatpush1.msra.mxu0 0.0
    %1712 = vmatprep.subr.mxu0 0.0
    %1713 = vmatpush1.msra.mxu0 0.0
    %1714 = vmatprep.subr.mxu0 0.0
    %1715 = vmatpush1.msra.mxu0 0.0
    %1716 = vmatprep.subr.mxu0 0.0
    %1717 = vmatpush1.msra.mxu0 0.0
    %1718 = vmatprep.subr.mxu0 0.0
    %1719 = vmatpush1.msra.mxu0 0.0
    %1720 = vmatprep.subr.mxu0 0.0
    %1721 = vmatpush1.msra.mxu0 0.0
    %1722 = vmatprep.subr.mxu0 0.0
    %1723 = vmatpush1.msra.mxu0 0.0
    %1724 = vmatprep.subr.mxu0 0.0
    %1725 = vmatpush1.msra.mxu0 0.0
    %1726 = vmatprep.subr.mxu0 0.0
    %1727 = vmatpush1.msra.mxu0 0.0
    %1728 = vmatprep.subr.mxu0 0.0
    %1729 = vmatpush1.msra.mxu0 0.0
    %1730 = vmatprep.subr.mxu0 0.0
    %1731 = vmatpush1.msra.mxu0 0.0
    %1732 = vmatprep.subr.mxu0 0.0
    %1733 = vmatpush1.msra.mxu0 0.0
    %1734 = vmatprep.subr.mxu0 0.0
    %1735 = vmatpush1.msra.mxu0 0.0
    %1736 = vmatprep.subr.mxu0 0.0
    %1737 = vmatpush1.msra.mxu0 0.0
    %1738 = vmatprep.subr.mxu0 0.0
    %1739 = vmatpush1.msra.mxu0 0.0
    %1740 = vmatprep.subr.mxu0 0.0
    %1741 = vmatpush1.msra.mxu0 0.0
    %1742 = vmatprep.subr.mxu0 0.0
    %1743 = vmatpush1.msra.mxu0 0.0
    %1744 = vmatprep.subr.mxu0 0.0
    %1745 = vmatpush1.msra.mxu0 0.0
    %1746 = vmatprep.subr.mxu0 0.0
    %1747 = vmatpush1.msra.mxu0 0.0
    %1748 = vmatprep.subr.mxu0 0.0
    %1749 = vmatpush1.msra.mxu0 0.0
    %1750 = vmatprep.mubr.f32.mxu0 0.0
    %1751 = vmatmul.mubr.f32.gmra.mrb[0].mxu0 %v1684
    %v1752 = vpop.f32.mrb[0].mxu0
    %v1753 = vadd.f32 0.0, %v1752
    %v1754 = vpop.f32.mrb[0].mxu0
    %1755 = vdwg.mxu0
    %1758 = vrot.lane.b32.xlu0 %v1315, 8
    %v1759 = vpop.permute.xlu0 %1758
    %1760 = vrot.lane.b32.xlu0 %v1607, 8
    %v1761 = vpop.permute.xlu0 %1760
    %1766 = vrot.lane.b32.xlu0 %v1388, 16
    %v1767 = vpop.permute.xlu0 %1766
    %1768 = vrot.lane.b32.xlu0 %v1680, 16
    %v1769 = vpop.permute.xlu0 %1768
    %1774 = vrot.lane.b32.xlu0 %v1461, 24
    %v1775 = vpop.permute.xlu0 %1774
    %1776 = vrot.lane.b32.xlu0 %v1753, 24
    %v1777 = vpop.permute.xlu0 %1776
    %v1780 = vsel %vm471, %v1242, %v1759
    %v1781 = vsel %vm471, %v1534, %v1761
    %vm1782 = vcmask 130048
    %v1783 = vsel %vm1782, %v1780, %v1767
    %v1784 = vsel %vm1782, %v1781, %v1769
    %vm1785 = vcmask 195584
    %v1786 = vsel %vm1785, %v1783, %v1775
    %v1787 = vsel %vm1785, %v1784, %v1777
    %v1788 = vld [vmem:[%s10] sm:$0xff]
    %v1789 = vld [vmem:[%s10 + $0x8] sm:$0xff]
    %v1790 = vld [vmem:[%s10 + $0x10] sm:$0xff]
    %v1791 = vld [vmem:[%s10 + $0x18] sm:$0xff]
    %v1792 = vld [vmem:[%s11] sm:$0x1]
    %v1794 = vlaneseq
    %v1795 = vshrl.u32 %v1794, 7
    %v1796 = vsub.s32 0, %v1795
    %v1797 = vrot.slane %v1792, %v1796
    %v1800 = vsel %vm157, %v1786, 0
    %v1803 = vsel %vm157, %v1787, 0
    %1805 = vmatprep.subr.mxu0 0.0
    %1806 = vmatpush1.msra.mxu0 %v1788
    %1807 = vmatprep.subr.mxu0 0.0
    %1808 = vmatpush1.msra.mxu0 %v1789
    %1809 = vmatprep.subr.mxu0 0.0
    %1810 = vmatpush1.msra.mxu0 %v1790
    %1811 = vmatprep.subr.mxu0 0.0
    %1812 = vmatpush1.msra.mxu0 %v1791
    %1813 = vmatprep.subr.mxu0 0.0
    %1814 = vmatpush1.msra.mxu0 0.0
    %1815 = vmatprep.subr.mxu0 0.0
    %1816 = vmatpush1.msra.mxu0 0.0
    %1817 = vmatprep.subr.mxu0 0.0
    %1818 = vmatpush1.msra.mxu0 0.0
    %1819 = vmatprep.subr.mxu0 0.0
    %1820 = vmatpush1.msra.mxu0 0.0
    %1821 = vmatprep.subr.mxu0 0.0
    %1822 = vmatpush1.msra.mxu0 0.0
    %1823 = vmatprep.subr.mxu0 0.0
    %1824 = vmatpush1.msra.mxu0 0.0
    %1825 = vmatprep.subr.mxu0 0.0
    %1826 = vmatpush1.msra.mxu0 0.0
    %1827 = vmatprep.subr.mxu0 0.0
    %1828 = vmatpush1.msra.mxu0 0.0
    %1829 = vmatprep.subr.mxu0 0.0
    %1830 = vmatpush1.msra.mxu0 0.0
    %1831 = vmatprep.subr.mxu0 0.0
    %1832 = vmatpush1.msra.mxu0 0.0
    %1833 = vmatprep.subr.mxu0 0.0
    %1834 = vmatpush1.msra.mxu0 0.0
    %1835 = vmatprep.subr.mxu0 0.0
    %1836 = vmatpush1.msra.mxu0 0.0
    %1837 = vmatprep.subr.mxu0 0.0
    %1838 = vmatpush1.msra.mxu0 0.0
    %1839 = vmatprep.subr.mxu0 0.0
    %1840 = vmatpush1.msra.mxu0 0.0
    %1841 = vmatprep.subr.mxu0 0.0
    %1842 = vmatpush1.msra.mxu0 0.0
    %1843 = vmatprep.subr.mxu0 0.0
    %1844 = vmatpush1.msra.mxu0 0.0
    %1845 = vmatprep.subr.mxu0 0.0
    %1846 = vmatpush1.msra.mxu0 0.0
    %1847 = vmatprep.subr.mxu0 0.0
    %1848 = vmatpush1.msra.mxu0 0.0
    %1849 = vmatprep.subr.mxu0 0.0
    %1850 = vmatpush1.msra.mxu0 0.0
    %1851 = vmatprep.subr.mxu0 0.0
    %1852 = vmatpush1.msra.mxu0 0.0
    %1853 = vmatprep.subr.mxu0 0.0
    %1854 = vmatpush1.msra.mxu0 0.0
    %1855 = vmatprep.subr.mxu0 0.0
    %1856 = vmatpush1.msra.mxu0 0.0
    %1857 = vmatprep.subr.mxu0 0.0
    %1858 = vmatpush1.msra.mxu0 0.0
    %1859 = vmatprep.subr.mxu0 0.0
    %1860 = vmatpush1.msra.mxu0 0.0
    %1861 = vmatprep.subr.mxu0 0.0
    %1862 = vmatpush1.msra.mxu0 0.0
    %1863 = vmatprep.subr.mxu0 0.0
    %1864 = vmatpush1.msra.mxu0 0.0
    %1865 = vmatprep.subr.mxu0 0.0
    %1866 = vmatpush1.msra.mxu0 0.0
    %1867 = vmatprep.subr.mxu0 0.0
    %1868 = vmatpush1.msra.mxu0 0.0
    %1869 = vmatprep.mubr.f32.mxu0 0.0
    %1870 = vmatmul.mubr.f32.gmra.mrb[0].mxu0 %v1800
    %v1871 = vpop.f32.mrb[0].mxu0
    %v1872 = vadd.f32 %v1797, %v1871
    %v1873 = vpop.f32.mrb[0].mxu0
    %1874 = vmatprep.mubr.f32.mxu0 0.0
    %1875 = vmatmul.mubr.f32.gmra.mrb[0].mxu0 %v1803
    %v1876 = vpop.f32.mrb[0].mxu0
    %v1877 = vadd.f32 %v1797, %v1876
    %v1878 = vpop.f32.mrb[0].mxu0
    %1879 = vdwg.mxu0
    %1880 = vst.msk [vmem:[#allocation14] sm:$0xff] %vm157, %v1872
    %1881 = vst.msk [vmem:[#allocation14 + $0x8] sm:$0xff] %vm157, %v1877
    %1882 = vrot.lane.b32.xlu0 %v1159, 8
    %v1883 = vpop.permute.xlu0 %1882
    %1884 = vrot.lane.b32.xlu0 %v1167, 8
    %v1885 = vpop.permute.xlu0 %1884
    %1888 = vrot.lane.b32.xlu0 %v1161, 16
    %v1889 = vpop.permute.xlu0 %1888
    %1890 = vrot.lane.b32.xlu0 %v1169, 16
    %v1891 = vpop.permute.xlu0 %1890
    %1894 = vrot.lane.b32.xlu0 %v1163, 24
    %v1895 = vpop.permute.xlu0 %1894
    %1896 = vrot.lane.b32.xlu0 %v1171, 24
    %v1897 = vpop.permute.xlu0 %1896
    %v1900 = vsel %vm471, %v1157, %v1883
    %v1901 = vsel %vm471, %v1165, %v1885
    %v1902 = vsel %vm1782, %v1900, %v1889
    %v1903 = vsel %vm1782, %v1901, %v1891
    %v1904 = vsel %vm1785, %v1902, %v1895
    %v1905 = vsel %vm1785, %v1903, %v1897
    %1906 = vst.msk [vmem:[#allocation15] sm:$0xff] %vm157, %v1904
    %1907 = vst.msk [vmem:[#allocation15 + $0x8] sm:$0xff] %vm157, %v1905
    // Predicated region
    $region78: #{tpu_custom_call.1} parent=1 // pred_check
      _
    $region79: #{tpu_custom_call.1} parent=1 // pred_check_branch
      %1909 = sbr.rel (0) target = $region81
    $region80: #{tpu_custom_call.1} parent=1 // pred_region
      %s1911 = ssub.s32 256, 256
      %1912 = vsyncadd [#allocation4], %s1911
      %s1913 = sshll.u32 [#allocation14], 4
      %s1914 = int_to_ptr.vmem [resolvable:$true] %s1913
      %1919 = dma.vmem_to_hbm [thread:$0]  %s1914, 256, %s12, [#allocation4], 128, 128, 8
    $region81: #{tpu_custom_call.1} parent=1 // pred_fallthru
      _
    // Predicated region
    $region82: #{tpu_custom_call.1} parent=1 // pred_check
      _
    $region83: #{tpu_custom_call.1} parent=1 // pred_check_branch
      %1921 = sbr.rel (0) target = $region85
    $region84: #{tpu_custom_call.1} parent=1 // pred_region
      %s1923 = ssub.s32 256, 256
      %1924 = vsyncadd [#allocation16], %s1923
      %s1925 = sshll.u32 [#allocation15], 4
      %s1926 = int_to_ptr.vmem [resolvable:$true] %s1925
      %1931 = dma.vmem_to_hbm [thread:$0]  %s1926, 256, %s13, [#allocation16], 128, 128, 8
    $region85: #{tpu_custom_call.1} parent=1 // pred_fallthru
      _
    // Predicated region
    $region86: #{tpu_custom_call.1} parent=1 // pred_check
      _
    $region87: #{tpu_custom_call.1} parent=1 // pred_check_branch
      %1933 = sbr.rel (0) target = $region89
    $region88: #{tpu_custom_call.1} parent=1 // pred_region
      %1934 = dma.done [#allocation4], 256
    $region89: #{tpu_custom_call.1} parent=1 // pred_fallthru
      _
    // Predicated region
    $region90: #{tpu_custom_call.1} parent=1 // pred_check
      _
    $region91: #{tpu_custom_call.1} parent=1 // pred_check_branch
      %1936 = sbr.rel (0) target = $region93
    $region92: #{tpu_custom_call.1} parent=1 // pred_region
      %1937 = dma.done [#allocation16], 256
    $region93: #{tpu_custom_call.1} parent=1 // pred_fallthru
      _
    %1938 = vsyncpa [#allocation3], 1
    %1939 = vsyncpa [#allocation6], 1
    %1940 = vsyncpa [#allocation9], 1
    %1941 = vsyncpa [#allocation12], 1
    %1942 = vsyncpa [#allocation4], 1
    %1943 = vsyncpa [#allocation16], 1

</llo_original>
